<compile_context>
chip_gen: v7x
topology: tpu7x:2x2x1
jax: 0.10.0
libtpu: 0.0.40
codegen_flags: <defaults>
</compile_context>

<pallas_src>
import functools
import math

import jax
import jax.numpy as jnp
import numpy as np
from jax.experimental import pallas as pl
from jax.experimental.pallas import tpu as pltpu


# ----------------------------------------------------------------------------
# Kernel: full encoder stack.  grid = (batch_blocks, layers).
# The activation is carried across the layer axis in a VMEM scratch.
# ----------------------------------------------------------------------------
def encoder_stack_kernel(x_ref,
                         cosq_ref, sinq_ref, cosk_ref, sink_ref,
                         ln1w_ref, ln1b_ref,
                         w_in_ref, gnw_ref, gnb_ref, wo_ref,
                         ln2w_ref, ln2b_ref,
                         ff1w_ref, ff1b_ref, ff2w_ref, ff2b_ref,
                         out_ref,
                         h_ref,
                         *, heads, head_size, block_b, seq_len, log_gammas):
    l = pl.program_id(1)
    num_layers = pl.num_programs(1)
    H = heads * head_size
    S = seq_len
    rows = block_b * S

    # ---- load activation into resident VMEM scratch at the first layer ----
    @pl.when(l == 0)
    def _():
        if block_b == 1:
            h_ref[...] = x_ref[0]
        else:
            h_ref[...] = x_ref[...].reshape(rows, H)

    x = h_ref[...]                                            # (rows, H) f32

    # ---- LayerNorm 1 (eps=1e-5, affine, biased variance) ----
    mu = jnp.mean(x, axis=-1, keepdims=True)
    var = jnp.mean((x - mu) ** 2, axis=-1, keepdims=True)
    xn = (x - mu) * jax.lax.rsqrt(var + 1e-5) * ln1w_ref[0] + ln1b_ref[0]

    # ---- Fused projections: one lane-dense bf16 matmul ----
    # w_in = [W_Q | W_Q@R | W_K | W_K@R | W_V | W_G]  (H, 6H), bf16.
    xn_bf = xn.astype(jnp.bfloat16)
    proj = jnp.dot(xn_bf, w_in_ref[0], preferred_element_type=jnp.float32)   # (rows, 6H)
    q_raw = proj[:, 0 * H:1 * H]
    q_rot = proj[:, 1 * H:2 * H]      # rotate_every_two(Q), rotation folded into weights
    k_raw = proj[:, 2 * H:3 * H]
    k_rot = proj[:, 3 * H:4 * H]
    v_all = proj[:, 4 * H:5 * H]
    g_all = proj[:, 5 * H:6 * H]

    # ---- xpos rotary (elementwise only; cos/sin pre-tiled across heads/rows) ----
    q_all = q_raw * cosq_ref[...] + q_rot * sinq_ref[...]
    k_all = k_raw * cosk_ref[...] + k_rot * sink_ref[...]

    # ---- decay mask D generated in-kernel (VPU/EUP), clamped exponent ----
    n_idx = jax.lax.broadcasted_iota(jnp.int32, (S, S), 0)
    m_idx = jax.lax.broadcasted_iota(jnp.int32, (S, S), 1)
    causal = n_idx >= m_idx
    delta = jnp.where(causal, n_idx - m_idx, 0).astype(jnp.float32)
    d_masks = [jnp.where(causal, jnp.exp(delta * lg), 0.0) for lg in log_gammas]

    q_bf = q_all.astype(jnp.bfloat16)
    k_bf = k_all.astype(jnp.bfloat16)
    v_bf = v_all.astype(jnp.bfloat16)

    # ---- per-(batch, head) retention scores; everything else stays fused ----
    batch_parts = []
    for b in range(block_b):
        r0 = b * S
        head_parts = []
        for h in range(heads):
            c0 = h * head_size
            qh = q_bf[r0:r0 + S, c0:c0 + head_size]
            kh = k_bf[r0:r0 + S, c0:c0 + head_size]
            vh = v_bf[r0:r0 + S, c0:c0 + head_size]
            ret = jax.lax.dot_general(qh, kh, (((1,), (1,)), ((), ())),
                                      preferred_element_type=jnp.float32)   # (S, S)
            ret = ret * d_masks[h]
            yh = jnp.dot(ret.astype(jnp.bfloat16), vh,
                         preferred_element_type=jnp.float32)                # (S, hs)
            # GroupNorm (one group per head): per-row stats, biased var, eps=1e-5
            gm = jnp.mean(yh, axis=-1, keepdims=True)
            gv = jnp.mean((yh - gm) ** 2, axis=-1, keepdims=True)
            head_parts.append((yh - gm) * jax.lax.rsqrt(gv + 1e-5))
        batch_parts.append(jnp.concatenate(head_parts, axis=-1))            # (S, H)
    y = batch_parts[0] if block_b == 1 else jnp.concatenate(batch_parts, axis=0)
    y = y * gnw_ref[0] + gnb_ref[0]                                          # GN affine

    # ---- swish gate + single lane-dense output projection ----
    gate = g_all * jax.nn.sigmoid(g_all)
    gated = (gate * y).astype(jnp.bfloat16)
    msr = jnp.dot(gated, wo_ref[0], preferred_element_type=jnp.float32)      # (rows, H)

    y1 = msr + x                                              # residual 1

    # ---- LayerNorm 2 ----
    mu2 = jnp.mean(y1, axis=-1, keepdims=True)
    var2 = jnp.mean((y1 - mu2) ** 2, axis=-1, keepdims=True)
    yn = (y1 - mu2) * jax.lax.rsqrt(var2 + 1e-5) * ln2w_ref[0] + ln2b_ref[0]

    # ---- FFN: Linear -> GELU (exact erf) -> Linear (bf16 matmuls, f32 accum) ----
    h1 = jnp.dot(yn.astype(jnp.bfloat16), ff1w_ref[0],
                 preferred_element_type=jnp.float32) + ff1b_ref[0]
    h1 = 0.5 * h1 * (1.0 + jax.lax.erf(h1 * 0.7071067811865476))
    h2 = jnp.dot(h1.astype(jnp.bfloat16), ff2w_ref[0],
                 preferred_element_type=jnp.float32) + ff2b_ref[0]

    h_new = h2 + y1                                           # residual 2
    h_ref[...] = h_new                                        # carry to next layer

    @pl.when(l == num_layers - 1)
    def _():
        if block_b == 1:
            out_ref[0] = h_new
        else:
            out_ref[...] = h_new.reshape(block_b, S, H)


# ----------------------------------------------------------------------------
# Wrapper: one pallas_call for the whole encoder stack.
# ----------------------------------------------------------------------------
def encoder_forward(x, stacked, consts, *, heads, head_size, block_b=1):
    B, S, H = x.shape
    assert H == heads * head_size
    assert B % block_b == 0
    L = stacked["w_in"].shape[0]
    FF = stacked["ff1w"].shape[-1]
    rows = block_b * S

    kernel = functools.partial(
        encoder_stack_kernel, heads=heads, head_size=head_size,
        block_b=block_b, seq_len=S, log_gammas=consts["log_gammas"])

    def bmap(b, l):        # batch-indexed, layer-invariant (activation / output)
        return (b, 0, 0)

    def cmap(b, l):        # grid-invariant constants (xpos tables)
        return (0, 0)

    def lmap(b, l):        # layer-stacked weights
        return (l, 0, 0)

    in_arrays = [
        x,
        consts["cos_q"], consts["sin_q"], consts["cos_k"], consts["sin_k"],
        stacked["ln1w"], stacked["ln1b"],
        stacked["w_in"], stacked["gnw"], stacked["gnb"], stacked["wo"],
        stacked["ln2w"], stacked["ln2b"],
        stacked["ff1w"], stacked["ff1b"], stacked["ff2w"], stacked["ff2b"],
    ]
    in_specs = [pl.BlockSpec((block_b, S, H), bmap)]
    in_specs += [pl.BlockSpec((rows, H), cmap)] * 4
    in_specs += [pl.BlockSpec((1,) + a.shape[1:], lmap) for a in in_arrays[5:]]

    # Advisory cost estimate (helps XLA schedule around the custom call).
    mm_flops = 2 * B * L * S * H * (6 * H + H + 2 * FF) + 4 * B * L * S * S * H
    transcendentals = B * L * S * (H + FF) + (B // block_b) * L * heads * S * S
    bytes_accessed = (2 * B * S * H * 4
                      + L * (6 * H * H + H * H + 2 * H * FF) * 2
                      + L * (6 * H + 2 * FF) * 4
                      + 4 * rows * H * 4)
    cost = pl.CostEstimate(flops=int(mm_flops),
                           transcendentals=int(transcendentals),
                           bytes_accessed=int(bytes_accessed))

    return pl.pallas_call(
        kernel,
        out_shape=jax.ShapeDtypeStruct((B, S, H), jnp.float32),
        grid=(B // block_b, L),
        in_specs=in_specs,
        out_specs=pl.BlockSpec((block_b, S, H), bmap),
        scratch_shapes=[pltpu.VMEM((rows, H), jnp.float32)],
        compiler_params=pltpu.CompilerParams(
            dimension_semantics=("parallel", "arbitrary"),
            vmem_limit_bytes=32 * 1024 * 1024),
        cost_estimate=cost,
    )(*in_arrays)


# ----------------------------------------------------------------------------
# Deterministic parameter / constant construction (mirrors module __init__).
# ----------------------------------------------------------------------------
def make_rotation_matrix(H):
    # rotate_every_two as a signed permutation: y = x @ R  (pairs never cross
    # head boundaries since head_size is even, so one (H,H) R covers all heads)
    R = np.zeros((H, H), dtype=np.float32)
    for i in range(H // 2):
        R[2 * i + 1, 2 * i] = -1.0
        R[2 * i, 2 * i + 1] = 1.0
    return R


def make_consts(S, head_size, heads, block_b):
    half = head_size // 2
    scale_base = 512.0
    # xpos scale buffer + fixed sin/cos (offset = 0 in the parallel forward)
    scale_vec = (np.arange(0, head_size, 2).astype(np.float32)
                 + 0.4 * head_size) / (1.4 * head_size)
    pos = np.arange(S, dtype=np.float32)
    scale = scale_vec[None, :] ** (pos[:, None] / scale_base)           # (S, half)
    inv_freq = 1.0 / (10000.0 ** (np.arange(half, dtype=np.float32) / half))
    theta = np.einsum("i,j->ij", pos, inv_freq)
    sin, cos = np.sin(theta), np.cos(theta)
    dup = lambda m: np.repeat(m, 2, axis=-1).astype(np.float32)         # duplicate_interleave
    cos_q, sin_q = dup(cos * scale), dup(sin * scale)
    cos_k, sin_k = dup(cos / scale), dup(sin / scale)                   # downscale=True

    # pre-tile across heads (same xpos per head) and across the batch block
    tile = lambda m: np.tile(np.tile(m, (1, heads)), (block_b, 1))      # (block_b*S, H)

    # per-head gamma schedule (MultiScaleRetention); baked as static log-gammas
    gammas = 1.0 - np.exp(np.linspace(math.log(1 / 32), math.log(1 / 512), heads))
    log_gammas = tuple(float(np.log(g)) for g in gammas)

    return {
        "cos_q": jnp.asarray(tile(cos_q)), "sin_q": jnp.asarray(tile(sin_q)),
        "cos_k": jnp.asarray(tile(cos_k)), "sin_k": jnp.asarray(tile(sin_k)),
        "log_gammas": log_gammas,
    }


def init_layer_params(key, H, FF, heads, head_size, R_np):
    ks = jax.random.split(key, 9)
    f32 = jnp.float32
    bf16 = jnp.bfloat16
    R = jnp.asarray(R_np)

    def headcat(w):  # (heads, H, hs) -> (H, heads*hs), heads stacked along lanes
        return jnp.transpose(w, (1, 0, 2)).reshape(H, heads * head_size)

    # SimpleRetention per-head projections (randn / hidden_size)
    wq = headcat(jax.random.normal(ks[0], (heads, H, head_size), f32) / H)
    wk = headcat(jax.random.normal(ks[1], (heads, H, head_size), f32) / H)
    wv = headcat(jax.random.normal(ks[2], (heads, H, head_size), f32) / H)
    # MultiScaleRetention W_G (H, v_dim) and W_O (v_dim, H), v_dim == H
    wg = jax.random.normal(ks[3], (H, H), f32) / H
    wo = jax.random.normal(ks[4], (H, H), f32) / H

    # fused input-projection weight; xpos rotation folded in as W @ R
    w_in = jnp.concatenate([wq, wq @ R, wk, wk @ R, wv, wg], axis=1)    # (H, 6H)

    lim1 = 1.0 / math.sqrt(H)
    lim2 = 1.0 / math.sqrt(FF)
    p = {
        "ln1w": jnp.ones((1, H), f32), "ln1b": jnp.zeros((1, H), f32),
        "w_in": w_in.astype(bf16),
        "gnw": jnp.ones((1, H), f32), "gnb": jnp.zeros((1, H), f32),
        "wo": wo.astype(bf16),
        "ln2w": jnp.ones((1, H), f32), "ln2b": jnp.zeros((1, H), f32),
        "ff1w": jax.random.uniform(ks[5], (H, FF), f32, -lim1, lim1).astype(bf16),
        "ff1b": jax.random.uniform(ks[6], (1, FF), f32, -lim1, lim1),
        "ff2w": jax.random.uniform(ks[7], (FF, H), f32, -lim2, lim2).astype(bf16),
        "ff2b": jax.random.uniform(ks[8], (1, H), f32, -lim2, lim2),
    }
    return p


def stack_layers(layer_params):
    return {name: jnp.stack([p[name] for p in layer_params])
            for name in layer_params[0]}


if __name__ == "__main__":
    # Encoder(layers=2, hidden_size=32, ff_size=64, heads=4, double_v_dim=False)
    B, S, H, FF, heads, layers = 2, 8, 32, 64, 4, 2
    head_size = H // heads
    block_b = 1  # batch elements per program; grid = (B // block_b, layers)

    key = jax.random.PRNGKey(0)
    keys = jax.random.split(key, layers + 1)
    x = jax.random.normal(keys[0], (B, S, H), dtype=jnp.float32)

    R_np = make_rotation_matrix(H)
    params = stack_layers(
        [init_layer_params(keys[i + 1], H, FF, heads, head_size, R_np)
         for i in range(layers)])
    consts = make_consts(S, head_size, heads, block_b)

    out = encoder_forward(x, params, consts,
                          heads=heads, head_size=head_size, block_b=block_b)
    out = jax.block_until_ready(out)
    assert out.shape == (B, S, H) and out.dtype == jnp.float32
    print("KERNEL_OK")
</pallas_src>

<mosaic_0001>
module attributes {stable_mosaic.version = 11 : i64} {
  func.func @encoder_stack_kernel(%arg0: i32, %arg1: i32, %arg2: memref<1x8x32xf32, #tpu.memory_space<vmem>>, %arg3: memref<8x32xf32, #tpu.memory_space<vmem>>, %arg4: memref<8x32xf32, #tpu.memory_space<vmem>>, %arg5: memref<8x32xf32, #tpu.memory_space<vmem>>, %arg6: memref<8x32xf32, #tpu.memory_space<vmem>>, %arg7: memref<1x1x32xf32, #tpu.memory_space<vmem>>, %arg8: memref<1x1x32xf32, #tpu.memory_space<vmem>>, %arg9: memref<1x32x192xbf16, #tpu.memory_space<vmem>>, %arg10: memref<1x1x32xf32, #tpu.memory_space<vmem>>, %arg11: memref<1x1x32xf32, #tpu.memory_space<vmem>>, %arg12: memref<1x32x32xbf16, #tpu.memory_space<vmem>>, %arg13: memref<1x1x32xf32, #tpu.memory_space<vmem>>, %arg14: memref<1x1x32xf32, #tpu.memory_space<vmem>>, %arg15: memref<1x32x64xbf16, #tpu.memory_space<vmem>>, %arg16: memref<1x1x64xf32, #tpu.memory_space<vmem>>, %arg17: memref<1x64x32xbf16, #tpu.memory_space<vmem>>, %arg18: memref<1x1x32xf32, #tpu.memory_space<vmem>>, %arg19: memref<1x8x32xf32, #tpu.memory_space<vmem>>, %arg20: memref<8x32xf32, #tpu.memory_space<vmem>>) attributes {dimension_semantics = [#tpu.dimension_semantics<parallel>, #tpu.dimension_semantics<arbitrary>], iteration_bounds = array<i64: 2, 2>, scalar_prefetch = 0 : i64, scratch_operands = 1 : i64, tpu.core_type = #tpu.core_type<tc>, window_params = [{transform_indices = @transform_0, window_bounds = array<i64: 1, 8, 32>}, {pipeline_mode = #tpu.pipeline_mode<synchronous>, transform_indices = @transform_1, window_bounds = array<i64: 8, 32>}, {pipeline_mode = #tpu.pipeline_mode<synchronous>, transform_indices = @transform_2, window_bounds = array<i64: 8, 32>}, {pipeline_mode = #tpu.pipeline_mode<synchronous>, transform_indices = @transform_3, window_bounds = array<i64: 8, 32>}, {pipeline_mode = #tpu.pipeline_mode<synchronous>, transform_indices = @transform_4, window_bounds = array<i64: 8, 32>}, {transform_indices = @transform_5, window_bounds = array<i64: 1, 1, 32>}, {transform_indices = @transform_6, window_bounds = array<i64: 1, 1, 32>}, {transform_indices = @transform_7, window_bounds = array<i64: 1, 32, 192>}, {transform_indices = @transform_8, window_bounds = array<i64: 1, 1, 32>}, {transform_indices = @transform_9, window_bounds = array<i64: 1, 1, 32>}, {transform_indices = @transform_10, window_bounds = array<i64: 1, 32, 32>}, {transform_indices = @transform_11, window_bounds = array<i64: 1, 1, 32>}, {transform_indices = @transform_12, window_bounds = array<i64: 1, 1, 32>}, {transform_indices = @transform_13, window_bounds = array<i64: 1, 32, 64>}, {transform_indices = @transform_14, window_bounds = array<i64: 1, 1, 64>}, {transform_indices = @transform_15, window_bounds = array<i64: 1, 64, 32>}, {transform_indices = @transform_16, window_bounds = array<i64: 1, 1, 32>}, {transform_indices = @transform_17, window_bounds = array<i64: 1, 8, 32>}]} {
    %c0_i32 = arith.constant 0 : i32
    %0 = arith.cmpi eq, %arg1, %c0_i32 : i32
    %1 = arith.extui %0 : i1 to i32
    %c0_i32_0 = arith.constant 0 : i32
    %2 = arith.cmpi ne, %1, %c0_i32_0 : i32
    scf.if %2 {
      %c0_103 = arith.constant 0 : index
      %c0_104 = arith.constant 0 : index
      %c0_105 = arith.constant 0 : index
      %256 = vector.load %arg2[%c0_103, %c0_104, %c0_105] : memref<1x8x32xf32, #tpu.memory_space<vmem>>, vector<1x8x32xf32>
      %257 = vector.shape_cast %256 : vector<1x8x32xf32> to vector<8x32xf32>
      %c0_106 = arith.constant 0 : index
      %c0_107 = arith.constant 0 : index
      %258 = vector.load %arg20[%c0_106, %c0_107] : memref<8x32xf32, #tpu.memory_space<vmem>>, vector<8x32xf32>
      tpu.vector_store %arg20[%c0_106, %c0_107], %257 {strides = array<i32>} : memref<8x32xf32, #tpu.memory_space<vmem>>, vector<8x32xf32>,
    } else {
    }
    %c0 = arith.constant 0 : index
    %c0_1 = arith.constant 0 : index
    %3 = vector.load %arg20[%c0, %c0_1] : memref<8x32xf32, #tpu.memory_space<vmem>>, vector<8x32xf32>
    %cst = arith.constant dense<0.000000e+00> : vector<8xf32>
    %4 = vector.multi_reduction <add>, %3, %cst [1] : vector<8x32xf32> to vector<8xf32>
    %5 = vector.shape_cast %4 : vector<8xf32> to vector<8x1xf32>
    %cst_2 = arith.constant 3.200000e+01 : f32
    %6 = vector.broadcast %cst_2 : f32 to vector<8x1xf32>
    %7 = arith.divf %5, %6 : vector<8x1xf32>
    %8 = vector.broadcast %7 : vector<8x1xf32> to vector<8x32xf32>
    %9 = arith.subf %3, %8 : vector<8x32xf32>
    %10 = arith.mulf %9, %9 : vector<8x32xf32>
    %cst_3 = arith.constant dense<0.000000e+00> : vector<8xf32>
    %11 = vector.multi_reduction <add>, %10, %cst_3 [1] : vector<8x32xf32> to vector<8xf32>
    %12 = vector.shape_cast %11 : vector<8xf32> to vector<8x1xf32>
    %cst_4 = arith.constant 3.200000e+01 : f32
    %13 = vector.broadcast %cst_4 : f32 to vector<8x1xf32>
    %14 = arith.divf %12, %13 : vector<8x1xf32>
    %15 = vector.broadcast %7 : vector<8x1xf32> to vector<8x32xf32>
    %16 = arith.subf %3, %15 : vector<8x32xf32>
    %cst_5 = arith.constant 9.99999974E-6 : f32
    %17 = vector.broadcast %cst_5 : f32 to vector<8x1xf32>
    %18 = arith.addf %14, %17 : vector<8x1xf32>
    %19 = math.rsqrt %18 : vector<8x1xf32>
    %20 = vector.broadcast %19 : vector<8x1xf32> to vector<8x32xf32>
    %21 = arith.mulf %16, %20 : vector<8x32xf32>
    %c0_6 = arith.constant 0 : index
    %c0_7 = arith.constant 0 : index
    %c0_8 = arith.constant 0 : index
    %22 = vector.load %arg7[%c0_6, %c0_7, %c0_8] : memref<1x1x32xf32, #tpu.memory_space<vmem>>, vector<1x1x32xf32>
    %23 = vector.shape_cast %22 : vector<1x1x32xf32> to vector<1x32xf32>
    %24 = vector.broadcast %23 : vector<1x32xf32> to vector<8x32xf32>
    %25 = arith.mulf %21, %24 : vector<8x32xf32>
    %c0_9 = arith.constant 0 : index
    %c0_10 = arith.constant 0 : index
    %c0_11 = arith.constant 0 : index
    %26 = vector.load %arg8[%c0_9, %c0_10, %c0_11] : memref<1x1x32xf32, #tpu.memory_space<vmem>>, vector<1x1x32xf32>
    %27 = vector.shape_cast %26 : vector<1x1x32xf32> to vector<1x32xf32>
    %28 = vector.broadcast %27 : vector<1x32xf32> to vector<8x32xf32>
    %29 = arith.addf %25, %28 : vector<8x32xf32>
    %30 = arith.truncf %29 : vector<8x32xf32> to vector<8x32xbf16>
    %c0_12 = arith.constant 0 : index
    %c0_13 = arith.constant 0 : index
    %c0_14 = arith.constant 0 : index
    %31 = vector.load %arg9[%c0_12, %c0_13, %c0_14] : memref<1x32x192xbf16, #tpu.memory_space<vmem>>, vector<1x32x192xbf16>
    %32 = vector.shape_cast %31 : vector<1x32x192xbf16> to vector<32x192xbf16>
    %cst_15 = arith.constant dense<0.000000e+00> : vector<8x192xf32>
    %33 = tpu.matmul %30, %32, %cst_15 {dimension_numbers = #tpu.dot_dimension_numbers<[1], [0], [0], [1], [0, 0, 1, 1], [], []>} : vector<8x32xbf16>, vector<32x192xbf16>, vector<8x192xf32> -> vector<8x192xf32>
    %34 = vector.extract_strided_slice %33 {offsets = [0, 0], sizes = [8, 32], strides = [1, 1]} : vector<8x192xf32> to vector<8x32xf32>
    %35 = vector.extract_strided_slice %33 {offsets = [0, 32], sizes = [8, 32], strides = [1, 1]} : vector<8x192xf32> to vector<8x32xf32>
    %36 = vector.extract_strided_slice %33 {offsets = [0, 64], sizes = [8, 32], strides = [1, 1]} : vector<8x192xf32> to vector<8x32xf32>
    %37 = vector.extract_strided_slice %33 {offsets = [0, 96], sizes = [8, 32], strides = [1, 1]} : vector<8x192xf32> to vector<8x32xf32>
    %38 = vector.extract_strided_slice %33 {offsets = [0, 128], sizes = [8, 32], strides = [1, 1]} : vector<8x192xf32> to vector<8x32xf32>
    %39 = vector.extract_strided_slice %33 {offsets = [0, 160], sizes = [8, 32], strides = [1, 1]} : vector<8x192xf32> to vector<8x32xf32>
    %c0_16 = arith.constant 0 : index
    %c0_17 = arith.constant 0 : index
    %40 = vector.load %arg3[%c0_16, %c0_17] : memref<8x32xf32, #tpu.memory_space<vmem>>, vector<8x32xf32>
    %41 = arith.mulf %34, %40 : vector<8x32xf32>
    %c0_18 = arith.constant 0 : index
    %c0_19 = arith.constant 0 : index
    %42 = vector.load %arg4[%c0_18, %c0_19] : memref<8x32xf32, #tpu.memory_space<vmem>>, vector<8x32xf32>
    %43 = arith.mulf %35, %42 : vector<8x32xf32>
    %44 = arith.addf %41, %43 : vector<8x32xf32>
    %c0_20 = arith.constant 0 : index
    %c0_21 = arith.constant 0 : index
    %45 = vector.load %arg5[%c0_20, %c0_21] : memref<8x32xf32, #tpu.memory_space<vmem>>, vector<8x32xf32>
    %46 = arith.mulf %36, %45 : vector<8x32xf32>
    %c0_22 = arith.constant 0 : index
    %c0_23 = arith.constant 0 : index
    %47 = vector.load %arg6[%c0_22, %c0_23] : memref<8x32xf32, #tpu.memory_space<vmem>>, vector<8x32xf32>
    %48 = arith.mulf %37, %47 : vector<8x32xf32>
    %49 = arith.addf %46, %48 : vector<8x32xf32>
    %50 = tpu.iota {dimensions = array<i32: 0>} : vector<8x8xi32>
    %51 = tpu.iota {dimensions = array<i32: 1>} : vector<8x8xi32>
    %52 = arith.cmpi sge, %50, %51 : vector<8x8xi32>
    %53 = arith.subi %50, %51 : vector<8x8xi32>
    %c0_i32_24 = arith.constant 0 : i32
    %54 = vector.broadcast %c0_i32_24 : i32 to vector<8x8xi32>
    %55 = arith.select %52, %53, %54 : vector<8x8xi1>, vector<8x8xi32>
    %56 = arith.sitofp %55 : vector<8x8xi32> to vector<8x8xf32>
    %cst_25 = arith.constant -0.0317486972 : f32
    %57 = vector.broadcast %cst_25 : f32 to vector<8x8xf32>
    %58 = arith.mulf %56, %57 : vector<8x8xf32>
    %59 = math.exp %58 : vector<8x8xf32>
    %cst_26 = arith.constant 0.000000e+00 : f32
    %60 = vector.broadcast %cst_26 : f32 to vector<8x8xf32>
    %61 = arith.select %52, %59, %60 : vector<8x8xi1>, vector<8x8xf32>
    %cst_27 = arith.constant -0.0124791116 : f32
    %62 = vector.broadcast %cst_27 : f32 to vector<8x8xf32>
    %63 = arith.mulf %56, %62 : vector<8x8xf32>
    %64 = math.exp %63 : vector<8x8xf32>
    %cst_28 = arith.constant 0.000000e+00 : f32
    %65 = vector.broadcast %cst_28 : f32 to vector<8x8xf32>
    %66 = arith.select %52, %64, %65 : vector<8x8xi1>, vector<8x8xf32>
    %cst_29 = arith.constant -0.00493371719 : f32
    %67 = vector.broadcast %cst_29 : f32 to vector<8x8xf32>
    %68 = arith.mulf %56, %67 : vector<8x8xf32>
    %69 = math.exp %68 : vector<8x8xf32>
    %cst_30 = arith.constant 0.000000e+00 : f32
    %70 = vector.broadcast %cst_30 : f32 to vector<8x8xf32>
    %71 = arith.select %52, %69, %70 : vector<8x8xi1>, vector<8x8xf32>
    %cst_31 = arith.constant -0.00195503491 : f32
    %72 = vector.broadcast %cst_31 : f32 to vector<8x8xf32>
    %73 = arith.mulf %56, %72 : vector<8x8xf32>
    %74 = math.exp %73 : vector<8x8xf32>
    %cst_32 = arith.constant 0.000000e+00 : f32
    %75 = vector.broadcast %cst_32 : f32 to vector<8x8xf32>
    %76 = arith.select %52, %74, %75 : vector<8x8xi1>, vector<8x8xf32>
    %77 = arith.truncf %44 : vector<8x32xf32> to vector<8x32xbf16>
    %78 = arith.truncf %49 : vector<8x32xf32> to vector<8x32xbf16>
    %79 = arith.truncf %38 : vector<8x32xf32> to vector<8x32xbf16>
    %80 = vector.extract_strided_slice %77 {offsets = [0, 0], sizes = [8, 8], strides = [1, 1]} : vector<8x32xbf16> to vector<8x8xbf16>
    %81 = vector.extract_strided_slice %78 {offsets = [0, 0], sizes = [8, 8], strides = [1, 1]} : vector<8x32xbf16> to vector<8x8xbf16>
    %82 = vector.extract_strided_slice %79 {offsets = [0, 0], sizes = [8, 8], strides = [1, 1]} : vector<8x32xbf16> to vector<8x8xbf16>
    %cst_33 = arith.constant dense<0.000000e+00> : vector<8x8xf32>
    %83 = tpu.matmul %80, %81, %cst_33 {dimension_numbers = #tpu.dot_dimension_numbers<[1], [1], [0], [0], [0, 0, 1, 0], [], []>} : vector<8x8xbf16>, vector<8x8xbf16>, vector<8x8xf32> -> vector<8x8xf32>
    %84 = arith.mulf %83, %61 : vector<8x8xf32>
    %85 = arith.truncf %84 : vector<8x8xf32> to vector<8x8xbf16>
    %cst_34 = arith.constant dense<0.000000e+00> : vector<8x8xf32>
    %86 = tpu.matmul %85, %82, %cst_34 {dimension_numbers = #tpu.dot_dimension_numbers<[1], [0], [0], [1], [0, 0, 1, 1], [], []>} : vector<8x8xbf16>, vector<8x8xbf16>, vector<8x8xf32> -> vector<8x8xf32>
    %cst_35 = arith.constant dense<0.000000e+00> : vector<8xf32>
    %87 = vector.multi_reduction <add>, %86, %cst_35 [1] : vector<8x8xf32> to vector<8xf32>
    %88 = vector.shape_cast %87 : vector<8xf32> to vector<8x1xf32>
    %cst_36 = arith.constant 8.000000e+00 : f32
    %89 = vector.broadcast %cst_36 : f32 to vector<8x1xf32>
    %90 = arith.divf %88, %89 : vector<8x1xf32>
    %91 = vector.broadcast %90 : vector<8x1xf32> to vector<8x8xf32>
    %92 = arith.subf %86, %91 : vector<8x8xf32>
    %93 = arith.mulf %92, %92 : vector<8x8xf32>
    %cst_37 = arith.constant dense<0.000000e+00> : vector<8xf32>
    %94 = vector.multi_reduction <add>, %93, %cst_37 [1] : vector<8x8xf32> to vector<8xf32>
    %95 = vector.shape_cast %94 : vector<8xf32> to vector<8x1xf32>
    %cst_38 = arith.constant 8.000000e+00 : f32
    %96 = vector.broadcast %cst_38 : f32 to vector<8x1xf32>
    %97 = arith.divf %95, %96 : vector<8x1xf32>
    %98 = vector.broadcast %90 : vector<8x1xf32> to vector<8x8xf32>
    %99 = arith.subf %86, %98 : vector<8x8xf32>
    %cst_39 = arith.constant 9.99999974E-6 : f32
    %100 = vector.broadcast %cst_39 : f32 to vector<8x1xf32>
    %101 = arith.addf %97, %100 : vector<8x1xf32>
    %102 = math.rsqrt %101 : vector<8x1xf32>
    %103 = vector.broadcast %102 : vector<8x1xf32> to vector<8x8xf32>
    %104 = arith.mulf %99, %103 : vector<8x8xf32>
    %105 = vector.extract_strided_slice %77 {offsets = [0, 8], sizes = [8, 8], strides = [1, 1]} : vector<8x32xbf16> to vector<8x8xbf16>
    %106 = vector.extract_strided_slice %78 {offsets = [0, 8], sizes = [8, 8], strides = [1, 1]} : vector<8x32xbf16> to vector<8x8xbf16>
    %107 = vector.extract_strided_slice %79 {offsets = [0, 8], sizes = [8, 8], strides = [1, 1]} : vector<8x32xbf16> to vector<8x8xbf16>
    %cst_40 = arith.constant dense<0.000000e+00> : vector<8x8xf32>
    %108 = tpu.matmul %105, %106, %cst_40 {dimension_numbers = #tpu.dot_dimension_numbers<[1], [1], [0], [0], [0, 0, 1, 0], [], []>} : vector<8x8xbf16>, vector<8x8xbf16>, vector<8x8xf32> -> vector<8x8xf32>
    %109 = arith.mulf %108, %66 : vector<8x8xf32>
    %110 = arith.truncf %109 : vector<8x8xf32> to vector<8x8xbf16>
    %cst_41 = arith.constant dense<0.000000e+00> : vector<8x8xf32>
    %111 = tpu.matmul %110, %107, %cst_41 {dimension_numbers = #tpu.dot_dimension_numbers<[1], [0], [0], [1], [0, 0, 1, 1], [], []>} : vector<8x8xbf16>, vector<8x8xbf16>, vector<8x8xf32> -> vector<8x8xf32>
    %cst_42 = arith.constant dense<0.000000e+00> : vector<8xf32>
    %112 = vector.multi_reduction <add>, %111, %cst_42 [1] : vector<8x8xf32> to vector<8xf32>
    %113 = vector.shape_cast %112 : vector<8xf32> to vector<8x1xf32>
    %cst_43 = arith.constant 8.000000e+00 : f32
    %114 = vector.broadcast %cst_43 : f32 to vector<8x1xf32>
    %115 = arith.divf %113, %114 : vector<8x1xf32>
    %116 = vector.broadcast %115 : vector<8x1xf32> to vector<8x8xf32>
    %117 = arith.subf %111, %116 : vector<8x8xf32>
    %118 = arith.mulf %117, %117 : vector<8x8xf32>
    %cst_44 = arith.constant dense<0.000000e+00> : vector<8xf32>
    %119 = vector.multi_reduction <add>, %118, %cst_44 [1] : vector<8x8xf32> to vector<8xf32>
    %120 = vector.shape_cast %119 : vector<8xf32> to vector<8x1xf32>
    %cst_45 = arith.constant 8.000000e+00 : f32
    %121 = vector.broadcast %cst_45 : f32 to vector<8x1xf32>
    %122 = arith.divf %120, %121 : vector<8x1xf32>
    %123 = vector.broadcast %115 : vector<8x1xf32> to vector<8x8xf32>
    %124 = arith.subf %111, %123 : vector<8x8xf32>
    %cst_46 = arith.constant 9.99999974E-6 : f32
    %125 = vector.broadcast %cst_46 : f32 to vector<8x1xf32>
    %126 = arith.addf %122, %125 : vector<8x1xf32>
    %127 = math.rsqrt %126 : vector<8x1xf32>
    %128 = vector.broadcast %127 : vector<8x1xf32> to vector<8x8xf32>
    %129 = arith.mulf %124, %128 : vector<8x8xf32>
    %130 = vector.extract_strided_slice %77 {offsets = [0, 16], sizes = [8, 8], strides = [1, 1]} : vector<8x32xbf16> to vector<8x8xbf16>
    %131 = vector.extract_strided_slice %78 {offsets = [0, 16], sizes = [8, 8], strides = [1, 1]} : vector<8x32xbf16> to vector<8x8xbf16>
    %132 = vector.extract_strided_slice %79 {offsets = [0, 16], sizes = [8, 8], strides = [1, 1]} : vector<8x32xbf16> to vector<8x8xbf16>
    %cst_47 = arith.constant dense<0.000000e+00> : vector<8x8xf32>
    %133 = tpu.matmul %130, %131, %cst_47 {dimension_numbers = #tpu.dot_dimension_numbers<[1], [1], [0], [0], [0, 0, 1, 0], [], []>} : vector<8x8xbf16>, vector<8x8xbf16>, vector<8x8xf32> -> vector<8x8xf32>
    %134 = arith.mulf %133, %71 : vector<8x8xf32>
    %135 = arith.truncf %134 : vector<8x8xf32> to vector<8x8xbf16>
    %cst_48 = arith.constant dense<0.000000e+00> : vector<8x8xf32>
    %136 = tpu.matmul %135, %132, %cst_48 {dimension_numbers = #tpu.dot_dimension_numbers<[1], [0], [0], [1], [0, 0, 1, 1], [], []>} : vector<8x8xbf16>, vector<8x8xbf16>, vector<8x8xf32> -> vector<8x8xf32>
    %cst_49 = arith.constant dense<0.000000e+00> : vector<8xf32>
    %137 = vector.multi_reduction <add>, %136, %cst_49 [1] : vector<8x8xf32> to vector<8xf32>
    %138 = vector.shape_cast %137 : vector<8xf32> to vector<8x1xf32>
    %cst_50 = arith.constant 8.000000e+00 : f32
    %139 = vector.broadcast %cst_50 : f32 to vector<8x1xf32>
    %140 = arith.divf %138, %139 : vector<8x1xf32>
    %141 = vector.broadcast %140 : vector<8x1xf32> to vector<8x8xf32>
    %142 = arith.subf %136, %141 : vector<8x8xf32>
    %143 = arith.mulf %142, %142 : vector<8x8xf32>
    %cst_51 = arith.constant dense<0.000000e+00> : vector<8xf32>
    %144 = vector.multi_reduction <add>, %143, %cst_51 [1] : vector<8x8xf32> to vector<8xf32>
    %145 = vector.shape_cast %144 : vector<8xf32> to vector<8x1xf32>
    %cst_52 = arith.constant 8.000000e+00 : f32
    %146 = vector.broadcast %cst_52 : f32 to vector<8x1xf32>
    %147 = arith.divf %145, %146 : vector<8x1xf32>
    %148 = vector.broadcast %140 : vector<8x1xf32> to vector<8x8xf32>
    %149 = arith.subf %136, %148 : vector<8x8xf32>
    %cst_53 = arith.constant 9.99999974E-6 : f32
    %150 = vector.broadcast %cst_53 : f32 to vector<8x1xf32>
    %151 = arith.addf %147, %150 : vector<8x1xf32>
    %152 = math.rsqrt %151 : vector<8x1xf32>
    %153 = vector.broadcast %152 : vector<8x1xf32> to vector<8x8xf32>
    %154 = arith.mulf %149, %153 : vector<8x8xf32>
    %155 = vector.extract_strided_slice %77 {offsets = [0, 24], sizes = [8, 8], strides = [1, 1]} : vector<8x32xbf16> to vector<8x8xbf16>
    %156 = vector.extract_strided_slice %78 {offsets = [0, 24], sizes = [8, 8], strides = [1, 1]} : vector<8x32xbf16> to vector<8x8xbf16>
    %157 = vector.extract_strided_slice %79 {offsets = [0, 24], sizes = [8, 8], strides = [1, 1]} : vector<8x32xbf16> to vector<8x8xbf16>
    %cst_54 = arith.constant dense<0.000000e+00> : vector<8x8xf32>
    %158 = tpu.matmul %155, %156, %cst_54 {dimension_numbers = #tpu.dot_dimension_numbers<[1], [1], [0], [0], [0, 0, 1, 0], [], []>} : vector<8x8xbf16>, vector<8x8xbf16>, vector<8x8xf32> -> vector<8x8xf32>
    %159 = arith.mulf %158, %76 : vector<8x8xf32>
    %160 = arith.truncf %159 : vector<8x8xf32> to vector<8x8xbf16>
    %cst_55 = arith.constant dense<0.000000e+00> : vector<8x8xf32>
    %161 = tpu.matmul %160, %157, %cst_55 {dimension_numbers = #tpu.dot_dimension_numbers<[1], [0], [0], [1], [0, 0, 1, 1], [], []>} : vector<8x8xbf16>, vector<8x8xbf16>, vector<8x8xf32> -> vector<8x8xf32>
    %cst_56 = arith.constant dense<0.000000e+00> : vector<8xf32>
    %162 = vector.multi_reduction <add>, %161, %cst_56 [1] : vector<8x8xf32> to vector<8xf32>
    %163 = vector.shape_cast %162 : vector<8xf32> to vector<8x1xf32>
    %cst_57 = arith.constant 8.000000e+00 : f32
    %164 = vector.broadcast %cst_57 : f32 to vector<8x1xf32>
    %165 = arith.divf %163, %164 : vector<8x1xf32>
    %166 = vector.broadcast %165 : vector<8x1xf32> to vector<8x8xf32>
    %167 = arith.subf %161, %166 : vector<8x8xf32>
    %168 = arith.mulf %167, %167 : vector<8x8xf32>
    %cst_58 = arith.constant dense<0.000000e+00> : vector<8xf32>
    %169 = vector.multi_reduction <add>, %168, %cst_58 [1] : vector<8x8xf32> to vector<8xf32>
    %170 = vector.shape_cast %169 : vector<8xf32> to vector<8x1xf32>
    %cst_59 = arith.constant 8.000000e+00 : f32
    %171 = vector.broadcast %cst_59 : f32 to vector<8x1xf32>
    %172 = arith.divf %170, %171 : vector<8x1xf32>
    %173 = vector.broadcast %165 : vector<8x1xf32> to vector<8x8xf32>
    %174 = arith.subf %161, %173 : vector<8x8xf32>
    %cst_60 = arith.constant 9.99999974E-6 : f32
    %175 = vector.broadcast %cst_60 : f32 to vector<8x1xf32>
    %176 = arith.addf %172, %175 : vector<8x1xf32>
    %177 = math.rsqrt %176 : vector<8x1xf32>
    %178 = vector.broadcast %177 : vector<8x1xf32> to vector<8x8xf32>
    %179 = arith.mulf %174, %178 : vector<8x8xf32>
    %180 = tpu.concatenate %104, %129, %154, %179 in 1 : vector<8x8xf32>, vector<8x8xf32>, vector<8x8xf32>, vector<8x8xf32> -> vector<8x32xf32>
    %c0_61 = arith.constant 0 : index
    %c0_62 = arith.constant 0 : index
    %c0_63 = arith.constant 0 : index
    %181 = vector.load %arg10[%c0_61, %c0_62, %c0_63] : memref<1x1x32xf32, #tpu.memory_space<vmem>>, vector<1x1x32xf32>
    %182 = vector.shape_cast %181 : vector<1x1x32xf32> to vector<1x32xf32>
    %183 = vector.broadcast %182 : vector<1x32xf32> to vector<8x32xf32>
    %184 = arith.mulf %180, %183 : vector<8x32xf32>
    %c0_64 = arith.constant 0 : index
    %c0_65 = arith.constant 0 : index
    %c0_66 = arith.constant 0 : index
    %185 = vector.load %arg11[%c0_64, %c0_65, %c0_66] : memref<1x1x32xf32, #tpu.memory_space<vmem>>, vector<1x1x32xf32>
    %186 = vector.shape_cast %185 : vector<1x1x32xf32> to vector<1x32xf32>
    %187 = vector.broadcast %186 : vector<1x32xf32> to vector<8x32xf32>
    %188 = arith.addf %184, %187 : vector<8x32xf32>
    %189 = arith.negf %39 : vector<8x32xf32>
    %190 = math.exp %189 : vector<8x32xf32>
    %cst_67 = arith.constant 1.000000e+00 : f32
    %191 = vector.broadcast %cst_67 : f32 to vector<8x32xf32>
    %192 = arith.addf %191, %190 : vector<8x32xf32>
    %193 = arith.divf %191, %192 : vector<8x32xf32>
    %194 = arith.mulf %39, %193 : vector<8x32xf32>
    %195 = arith.mulf %194, %188 : vector<8x32xf32>
    %196 = arith.truncf %195 : vector<8x32xf32> to vector<8x32xbf16>
    %c0_68 = arith.constant 0 : index
    %c0_69 = arith.constant 0 : index
    %c0_70 = arith.constant 0 : index
    %197 = vector.load %arg12[%c0_68, %c0_69, %c0_70] : memref<1x32x32xbf16, #tpu.memory_space<vmem>>, vector<1x32x32xbf16>
    %198 = vector.shape_cast %197 : vector<1x32x32xbf16> to vector<32x32xbf16>
    %cst_71 = arith.constant dense<0.000000e+00> : vector<8x32xf32>
    %199 = tpu.matmul %196, %198, %cst_71 {dimension_numbers = #tpu.dot_dimension_numbers<[1], [0], [0], [1], [0, 0, 1, 1], [], []>} : vector<8x32xbf16>, vector<32x32xbf16>, vector<8x32xf32> -> vector<8x32xf32>
    %200 = arith.addf %199, %3 : vector<8x32xf32>
    %cst_72 = arith.constant dense<0.000000e+00> : vector<8xf32>
    %201 = vector.multi_reduction <add>, %200, %cst_72 [1] : vector<8x32xf32> to vector<8xf32>
    %202 = vector.shape_cast %201 : vector<8xf32> to vector<8x1xf32>
    %cst_73 = arith.constant 3.200000e+01 : f32
    %203 = vector.broadcast %cst_73 : f32 to vector<8x1xf32>
    %204 = arith.divf %202, %203 : vector<8x1xf32>
    %205 = vector.broadcast %204 : vector<8x1xf32> to vector<8x32xf32>
    %206 = arith.subf %200, %205 : vector<8x32xf32>
    %207 = arith.mulf %206, %206 : vector<8x32xf32>
    %cst_74 = arith.constant dense<0.000000e+00> : vector<8xf32>
    %208 = vector.multi_reduction <add>, %207, %cst_74 [1] : vector<8x32xf32> to vector<8xf32>
    %209 = vector.shape_cast %208 : vector<8xf32> to vector<8x1xf32>
    %cst_75 = arith.constant 3.200000e+01 : f32
    %210 = vector.broadcast %cst_75 : f32 to vector<8x1xf32>
    %211 = arith.divf %209, %210 : vector<8x1xf32>
    %212 = vector.broadcast %204 : vector<8x1xf32> to vector<8x32xf32>
    %213 = arith.subf %200, %212 : vector<8x32xf32>
    %cst_76 = arith.constant 9.99999974E-6 : f32
    %214 = vector.broadcast %cst_76 : f32 to vector<8x1xf32>
    %215 = arith.addf %211, %214 : vector<8x1xf32>
    %216 = math.rsqrt %215 : vector<8x1xf32>
    %217 = vector.broadcast %216 : vector<8x1xf32> to vector<8x32xf32>
    %218 = arith.mulf %213, %217 : vector<8x32xf32>
    %c0_77 = arith.constant 0 : index
    %c0_78 = arith.constant 0 : index
    %c0_79 = arith.constant 0 : index
    %219 = vector.load %arg13[%c0_77, %c0_78, %c0_79] : memref<1x1x32xf32, #tpu.memory_space<vmem>>, vector<1x1x32xf32>
    %220 = vector.shape_cast %219 : vector<1x1x32xf32> to vector<1x32xf32>
    %221 = vector.broadcast %220 : vector<1x32xf32> to vector<8x32xf32>
    %222 = arith.mulf %218, %221 : vector<8x32xf32>
    %c0_80 = arith.constant 0 : index
    %c0_81 = arith.constant 0 : index
    %c0_82 = arith.constant 0 : index
    %223 = vector.load %arg14[%c0_80, %c0_81, %c0_82] : memref<1x1x32xf32, #tpu.memory_space<vmem>>, vector<1x1x32xf32>
    %224 = vector.shape_cast %223 : vector<1x1x32xf32> to vector<1x32xf32>
    %225 = vector.broadcast %224 : vector<1x32xf32> to vector<8x32xf32>
    %226 = arith.addf %222, %225 : vector<8x32xf32>
    %227 = arith.truncf %226 : vector<8x32xf32> to vector<8x32xbf16>
    %c0_83 = arith.constant 0 : index
    %c0_84 = arith.constant 0 : index
    %c0_85 = arith.constant 0 : index
    %228 = vector.load %arg15[%c0_83, %c0_84, %c0_85] : memref<1x32x64xbf16, #tpu.memory_space<vmem>>, vector<1x32x64xbf16>
    %229 = vector.shape_cast %228 : vector<1x32x64xbf16> to vector<32x64xbf16>
    %cst_86 = arith.constant dense<0.000000e+00> : vector<8x64xf32>
    %230 = tpu.matmul %227, %229, %cst_86 {dimension_numbers = #tpu.dot_dimension_numbers<[1], [0], [0], [1], [0, 0, 1, 1], [], []>} : vector<8x32xbf16>, vector<32x64xbf16>, vector<8x64xf32> -> vector<8x64xf32>
    %c0_87 = arith.constant 0 : index
    %c0_88 = arith.constant 0 : index
    %c0_89 = arith.constant 0 : index
    %231 = vector.load %arg16[%c0_87, %c0_88, %c0_89] : memref<1x1x64xf32, #tpu.memory_space<vmem>>, vector<1x1x64xf32>
    %232 = vector.shape_cast %231 : vector<1x1x64xf32> to vector<1x64xf32>
    %233 = vector.broadcast %232 : vector<1x64xf32> to vector<8x64xf32>
    %234 = arith.addf %230, %233 : vector<8x64xf32>
    %cst_90 = arith.constant 5.000000e-01 : f32
    %235 = vector.broadcast %cst_90 : f32 to vector<8x64xf32>
    %236 = arith.mulf %235, %234 : vector<8x64xf32>
    %cst_91 = arith.constant 0.707106769 : f32
    %237 = vector.broadcast %cst_91 : f32 to vector<8x64xf32>
    %238 = arith.mulf %234, %237 : vector<8x64xf32>
    %239 = math.erf %238 : vector<8x64xf32>
    %cst_92 = arith.constant 1.000000e+00 : f32
    %240 = vector.broadcast %cst_92 : f32 to vector<8x64xf32>
    %241 = arith.addf %240, %239 : vector<8x64xf32>
    %242 = arith.mulf %236, %241 : vector<8x64xf32>
    %243 = arith.truncf %242 : vector<8x64xf32> to vector<8x64xbf16>
    %c0_93 = arith.constant 0 : index
    %c0_94 = arith.constant 0 : index
    %c0_95 = arith.constant 0 : index
    %244 = vector.load %arg17[%c0_93, %c0_94, %c0_95] : memref<1x64x32xbf16, #tpu.memory_space<vmem>>, vector<1x64x32xbf16>
    %245 = vector.shape_cast %244 : vector<1x64x32xbf16> to vector<64x32xbf16>
    %cst_96 = arith.constant dense<0.000000e+00> : vector<8x32xf32>
    %246 = tpu.matmul %243, %245, %cst_96 {dimension_numbers = #tpu.dot_dimension_numbers<[1], [0], [0], [1], [0, 0, 1, 1], [], []>} : vector<8x64xbf16>, vector<64x32xbf16>, vector<8x32xf32> -> vector<8x32xf32>
    %c0_97 = arith.constant 0 : index
    %c0_98 = arith.constant 0 : index
    %c0_99 = arith.constant 0 : index
    %247 = vector.load %arg18[%c0_97, %c0_98, %c0_99] : memref<1x1x32xf32, #tpu.memory_space<vmem>>, vector<1x1x32xf32>
    %248 = vector.shape_cast %247 : vector<1x1x32xf32> to vector<1x32xf32>
    %249 = vector.broadcast %248 : vector<1x32xf32> to vector<8x32xf32>
    %250 = arith.addf %246, %249 : vector<8x32xf32>
    %251 = arith.addf %250, %200 : vector<8x32xf32>
    %c0_100 = arith.constant 0 : index
    %c0_101 = arith.constant 0 : index
    %252 = vector.load %arg20[%c0_100, %c0_101] : memref<8x32xf32, #tpu.memory_space<vmem>>, vector<8x32xf32>
    tpu.vector_store %arg20[%c0_100, %c0_101], %251 {strides = array<i32>} : memref<8x32xf32, #tpu.memory_space<vmem>>, vector<8x32xf32>,
    %c1_i32 = arith.constant 1 : i32
    %253 = arith.cmpi eq, %arg1, %c1_i32 : i32
    %254 = arith.extui %253 : i1 to i32
    %c0_i32_102 = arith.constant 0 : i32
    %255 = arith.cmpi ne, %254, %c0_i32_102 : i32
    scf.if %255 {
      %c0_103 = arith.constant 0 : index
      %c0_104 = arith.constant 0 : index
      %c0_105 = arith.constant 0 : index
      %256 = vector.load %arg19[%c0_103, %c0_104, %c0_105] : memref<1x8x32xf32, #tpu.memory_space<vmem>>, vector<1x8x32xf32>
      %257 = vector.shape_cast %256 : vector<1x8x32xf32> to vector<8x32xf32>
      %258 = vector.shape_cast %251 : vector<8x32xf32> to vector<1x8x32xf32>
      tpu.vector_store %arg19[%c0_103, %c0_104, %c0_105], %258 {strides = array<i32>} : memref<1x8x32xf32, #tpu.memory_space<vmem>>, vector<1x8x32xf32>,
    } else {
    }
    return
  }
  func.func @transform_0(%arg0: i32, %arg1: i32) -> (i32, i32, i32) {
    %c0_i32 = arith.constant 0 : i32
    %c0_i32_0 = arith.constant 0 : i32
    %c0_i32_1 = arith.constant 0 : i32
    return %arg0, %c0_i32, %c0_i32_0 : i32, i32, i32
  }
  func.func @transform_1(%arg0: i32, %arg1: i32) -> (i32, i32) {
    %c0_i32 = arith.constant 0 : i32
    %c0_i32_0 = arith.constant 0 : i32
    %c0_i32_1 = arith.constant 0 : i32
    return %c0_i32, %c0_i32_0 : i32, i32
  }
  func.func @transform_2(%arg0: i32, %arg1: i32) -> (i32, i32) {
    %c0_i32 = arith.constant 0 : i32
    %c0_i32_0 = arith.constant 0 : i32
    %c0_i32_1 = arith.constant 0 : i32
    return %c0_i32, %c0_i32_0 : i32, i32
  }
  func.func @transform_3(%arg0: i32, %arg1: i32) -> (i32, i32) {
    %c0_i32 = arith.constant 0 : i32
    %c0_i32_0 = arith.constant 0 : i32
    %c0_i32_1 = arith.constant 0 : i32
    return %c0_i32, %c0_i32_0 : i32, i32
  }
  func.func @transform_4(%arg0: i32, %arg1: i32) -> (i32, i32) {
    %c0_i32 = arith.constant 0 : i32
    %c0_i32_0 = arith.constant 0 : i32
    %c0_i32_1 = arith.constant 0 : i32
    return %c0_i32, %c0_i32_0 : i32, i32
  }
  func.func @transform_5(%arg0: i32, %arg1: i32) -> (i32, i32, i32) {
    %c0_i32 = arith.constant 0 : i32
    %c0_i32_0 = arith.constant 0 : i32
    %c0_i32_1 = arith.constant 0 : i32
    return %arg1, %c0_i32, %c0_i32_0 : i32, i32, i32
  }
  func.func @transform_6(%arg0: i32, %arg1: i32) -> (i32, i32, i32) {
    %c0_i32 = arith.constant 0 : i32
    %c0_i32_0 = arith.constant 0 : i32
    %c0_i32_1 = arith.constant 0 : i32
    return %arg1, %c0_i32, %c0_i32_0 : i32, i32, i32
  }
  func.func @transform_7(%arg0: i32, %arg1: i32) -> (i32, i32, i32) {
    %c0_i32 = arith.constant 0 : i32
    %c0_i32_0 = arith.constant 0 : i32
    %c0_i32_1 = arith.constant 0 : i32
    return %arg1, %c0_i32, %c0_i32_0 : i32, i32, i32
  }
  func.func @transform_8(%arg0: i32, %arg1: i32) -> (i32, i32, i32) {
    %c0_i32 = arith.constant 0 : i32
    %c0_i32_0 = arith.constant 0 : i32
    %c0_i32_1 = arith.constant 0 : i32
    return %arg1, %c0_i32, %c0_i32_0 : i32, i32, i32
  }
  func.func @transform_9(%arg0: i32, %arg1: i32) -> (i32, i32, i32) {
    %c0_i32 = arith.constant 0 : i32
    %c0_i32_0 = arith.constant 0 : i32
    %c0_i32_1 = arith.constant 0 : i32
    return %arg1, %c0_i32, %c0_i32_0 : i32, i32, i32
  }
  func.func @transform_10(%arg0: i32, %arg1: i32) -> (i32, i32, i32) {
    %c0_i32 = arith.constant 0 : i32
    %c0_i32_0 = arith.constant 0 : i32
    %c0_i32_1 = arith.constant 0 : i32
    return %arg1, %c0_i32, %c0_i32_0 : i32, i32, i32
  }
  func.func @transform_11(%arg0: i32, %arg1: i32) -> (i32, i32, i32) {
    %c0_i32 = arith.constant 0 : i32
    %c0_i32_0 = arith.constant 0 : i32
    %c0_i32_1 = arith.constant 0 : i32
    return %arg1, %c0_i32, %c0_i32_0 : i32, i32, i32
  }
  func.func @transform_12(%arg0: i32, %arg1: i32) -> (i32, i32, i32) {
    %c0_i32 = arith.constant 0 : i32
    %c0_i32_0 = arith.constant 0 : i32
    %c0_i32_1 = arith.constant 0 : i32
    return %arg1, %c0_i32, %c0_i32_0 : i32, i32, i32
  }
  func.func @transform_13(%arg0: i32, %arg1: i32) -> (i32, i32, i32) {
    %c0_i32 = arith.constant 0 : i32
    %c0_i32_0 = arith.constant 0 : i32
    %c0_i32_1 = arith.constant 0 : i32
    return %arg1, %c0_i32, %c0_i32_0 : i32, i32, i32
  }
  func.func @transform_14(%arg0: i32, %arg1: i32) -> (i32, i32, i32) {
    %c0_i32 = arith.constant 0 : i32
    %c0_i32_0 = arith.constant 0 : i32
    %c0_i32_1 = arith.constant 0 : i32
    return %arg1, %c0_i32, %c0_i32_0 : i32, i32, i32
  }
  func.func @transform_15(%arg0: i32, %arg1: i32) -> (i32, i32, i32) {
    %c0_i32 = arith.constant 0 : i32
    %c0_i32_0 = arith.constant 0 : i32
    %c0_i32_1 = arith.constant 0 : i32
    return %arg1, %c0_i32, %c0_i32_0 : i32, i32, i32
  }
  func.func @transform_16(%arg0: i32, %arg1: i32) -> (i32, i32, i32) {
    %c0_i32 = arith.constant 0 : i32
    %c0_i32_0 = arith.constant 0 : i32
    %c0_i32_1 = arith.constant 0 : i32
    return %arg1, %c0_i32, %c0_i32_0 : i32, i32, i32
  }
  func.func @transform_17(%arg0: i32, %arg1: i32) -> (i32, i32, i32) {
    %c0_i32 = arith.constant 0 : i32
    %c0_i32_0 = arith.constant 0 : i32
    %c0_i32_1 = arith.constant 0 : i32
    return %arg0, %c0_i32, %c0_i32_0 : i32, i32, i32
  }
}

</mosaic_0001>

<llo_original>
// kernel: tpu_custom_call.1
$region0: #{tpu_custom_call.1}
  #allocation0 [shape = 'u32[]', space=smem, size = 0x4, offset = 0x4, fixed_abs, tag = 'smem constant byte address 0x4 - core index']
  #allocation1 [shape = 'u32[144,128]{1,0:T(1,128)}', space=vmem, size = 0x12000, scoped, tag = 'internal scratch']
  #allocation2 [shape = 'f32[8,32]{1,0:T(8,128)}', space=vmem, size = 0x1000, scoped, tag = 'scratch operand']
  %s0 = inlined_call_operand.vmem [shape: f32[2,8,32], index: 0, kind: input, shape index: {}]
  %s1 = inlined_call_operand.vmem [shape: f32[8,32], index: 1, kind: input, shape index: {}]
  %s2 = inlined_call_operand.hbm [shape: f32[8,32], index: 2, kind: input, shape index: {}]
  %s3 = inlined_call_operand.hbm [shape: f32[8,32], index: 3, kind: input, shape index: {}]
  %s4 = inlined_call_operand.hbm [shape: f32[8,32], index: 4, kind: input, shape index: {}]
  %s5 = inlined_call_operand.hbm [shape: f32[2,1,32], index: 5, kind: input, shape index: {}]
  %s6 = inlined_call_operand.hbm [shape: f32[2,1,32], index: 6, kind: input, shape index: {}]
  %s7 = inlined_call_operand.vmem [shape: bf16[2,32,192], index: 7, kind: input, shape index: {}]
  %s8 = inlined_call_operand.hbm [shape: f32[2,1,32], index: 8, kind: input, shape index: {}]
  %s9 = inlined_call_operand.hbm [shape: f32[2,1,32], index: 9, kind: input, shape index: {}]
  %s10 = inlined_call_operand.vmem [shape: bf16[2,32,32], index: 10, kind: input, shape index: {}]
  %s11 = inlined_call_operand.hbm [shape: f32[2,1,32], index: 11, kind: input, shape index: {}]
  %s12 = inlined_call_operand.hbm [shape: f32[2,1,32], index: 12, kind: input, shape index: {}]
  %s13 = inlined_call_operand.hbm [shape: bf16[2,32,64], index: 13, kind: input, shape index: {}]
  %s14 = inlined_call_operand.hbm [shape: f32[2,1,64], index: 14, kind: input, shape index: {}]
  %s15 = inlined_call_operand.vmem [shape: bf16[2,64,32], index: 15, kind: input, shape index: {}]
  %s16 = inlined_call_operand.vmem [shape: f32[2,1,32], index: 16, kind: input, shape index: {}]
  %s17 = inlined_call_operand.hbm [shape: f32[2,8,32], index: 17, kind: output, shape index: {}]
  %s18 = sld [smem:[#allocation0]]
  $region153: #{tpu_custom_call.1} parent=0
    _
  %s20 = ssub.s32 1, %s18
  %s21 = scalar_select 0, %s20, %s18
  $region1: #{tpu_custom_call.1} parent=0
    #allocation3 [shape = 'u8[4096]{0}', space=vmem, size = 0x1000, scoped, tag = 'input window, operand 2, single buffered']
    #allocation4 [shape = 's32[2]{0}', space=sflag, size = 0x8, scoped, tag = 'scoped memory for tpu_custom_call.1']
    #allocation5 [shape = 's32[2]{0}', space=sflag, size = 0x8, scoped, tag = 'scoped memory for tpu_custom_call.1']
    #allocation6 [shape = 'u8[4096]{0}', space=vmem, size = 0x1000, scoped, tag = 'input window, operand 3, single buffered']
    #allocation7 [shape = 's32[1]{0}', space=sflag, size = 0x4, scoped, tag = 'scoped memory for tpu_custom_call.1']
    #allocation8 [shape = 'u8[4096]{0}', space=vmem, size = 0x1000, scoped, tag = 'input window, operand 4, single buffered']
    #allocation9 [shape = 'u8[1024]{0}', space=vmem, size = 0x400, scoped, tag = 'input window, operand 5']
    #allocation10 [shape = 's32[2]{0}', space=sflag, size = 0x8, scoped, tag = 'scoped memory for tpu_custom_call.1']
    #allocation11 [shape = 'u8[1024]{0}', space=vmem, size = 0x400, scoped, tag = 'input window, operand 6']
    #allocation12 [shape = 'u8[1024]{0}', space=vmem, size = 0x400, scoped, tag = 'input window, operand 8']
    #allocation13 [shape = 's32[2]{0}', space=sflag, size = 0x8, scoped, tag = 'scoped memory for tpu_custom_call.1']
    #allocation14 [shape = 'u8[1024]{0}', space=vmem, size = 0x400, scoped, tag = 'input window, operand 9']
    #allocation15 [shape = 'u8[1024]{0}', space=vmem, size = 0x400, scoped, tag = 'input window, operand 11']
    #allocation16 [shape = 's32[2]{0}', space=sflag, size = 0x8, scoped, tag = 'scoped memory for tpu_custom_call.1']
    #allocation17 [shape = 'u8[1024]{0}', space=vmem, size = 0x400, scoped, tag = 'input window, operand 12']
    #allocation18 [shape = 'u8[16384]{0}', space=vmem, size = 0x4000, scoped, tag = 'input window, operand 13']
    #allocation19 [shape = 's32[2]{0}', space=sflag, size = 0x8, scoped, tag = 'scoped memory for tpu_custom_call.1']
    #allocation20 [shape = 'u8[1024]{0}', space=vmem, size = 0x400, scoped, tag = 'input window, operand 14']
    #allocation21 [shape = 'u8[8192]{0}', space=vmem, size = 0x2000, scoped, tag = 'output window, operand 0']
    %22 = vsyncpa [#allocation4], 0
    %23 = vsyncpa [#allocation7], 0
    %24 = vsyncpa [#allocation10], 0
    %s25 = scalar_lea.sflag [#allocation10], 1
    %26 = vsyncpa %s25, 0
    %27 = vsyncpa [#allocation13], 0
    %s28 = scalar_lea.sflag [#allocation13], 1
    %29 = vsyncpa %s28, 0
    %30 = vsyncpa [#allocation16], 0
    %s31 = scalar_lea.sflag [#allocation16], 1
    %32 = vsyncpa %s31, 0
    %33 = vsyncpa [#allocation19], 0
    %s34 = scalar_lea.sflag [#allocation19], 1
    %35 = vsyncpa %s34, 0
    %36 = vsyncpa [#allocation5], 0
    %s37 = scalar_lea.sflag [#allocation5], 1
    %38 = vsyncpa %s37, 0
    loop: start=0, step=1, limit=6
    $region2: #{tpu_custom_call.1} parent=1 // loop_pre_header
      _
    $region3: #{tpu_custom_call.1} parent=1 // loop_header
      %s40 = sphi 0, %s44
      %p41 = scmp.ge.s32.totalorder %s40, 6
      %s47 = sphi 0, %s59
      %s48 = sphi 0, %s55
      %s49 = sphi 0, %s47
      %s50 = sphi 0, %s48
      %s51 = sphi 0, %s49
      %s52 = sphi 0, %s50
      %s62 = sphi 0, %s64
      %s65 = sphi 0, %s62
      %s66 = sphi 0, %s65
      %s82 = sphi 0, %s66
      %s86 = sphi 0, %s86
      %s88 = sphi 0, %s86
      %s89 = sphi 0, %s88
      %s103 = sphi 0, %s89
      %s107 = sphi 0, %s107
      %s109 = sphi 0, %s107
      %s110 = sphi 0, %s109
      %s124 = sphi 0, %s110
      %s128 = sphi 0, %s128
      %s130 = sphi 0, %s128
      %s131 = sphi 0, %s130
      %s145 = sphi 0, %s131
      %s149 = sphi 0, %s149
      %s151 = sphi 0, %s149
      %s152 = sphi 0, %s151
      %s166 = sphi 0, %s152
      %s172 = sphi 0, %s174
      %s175 = sphi 0, %s172
      %s176 = sphi 0, %s175
      %s192 = sphi 0, %s176
      %s198 = sphi 0, %s200
      %s201 = sphi 0, %s198
      %s202 = sphi 0, %s201
      %s218 = sphi 0, %s202
      %s224 = sphi 0, %s226
      %s227 = sphi 0, %s224
      %s228 = sphi 0, %s227
      %s244 = sphi 0, %s228
      %s250 = sphi 0, %s252
      %s253 = sphi 0, %s250
      %s254 = sphi 0, %s253
      %s270 = sphi 0, %s254
      %s276 = sphi 0, %s278
      %s279 = sphi 0, %s276
      %s280 = sphi 0, %s279
      %s296 = sphi 0, %s280
      %s302 = sphi 0, %s304
      %s305 = sphi 0, %s302
      %s306 = sphi 0, %s305
      %s322 = sphi 0, %s306
      %s328 = sphi 0, %s330
      %s331 = sphi 0, %s328
      %s332 = sphi 0, %s331
      %s348 = sphi 0, %s332
      %s354 = sphi 0, %s356
      %s357 = sphi 0, %s354
      %s358 = sphi 0, %s357
      %s374 = sphi 0, %s358
      %s380 = sphi 0, %s382
      %s383 = sphi 0, %s380
      %s384 = sphi 0, %s383
      %s400 = sphi 0, %s384
      %s406 = sphi 0, %s408
      %s409 = sphi 0, %s406
      %s410 = sphi 0, %s409
      %s426 = sphi 0, %s410
      %s432 = sphi 0, %s434
      %s435 = sphi 0, %s432
      %s436 = sphi 0, %s435
      %s452 = sphi 0, %s436
      %s458 = sphi 0, %s460
      %s461 = sphi 0, %s458
      %s462 = sphi 0, %s461
      %s478 = sphi 0, %s462
      %s484 = sphi 0, %s486
      %s487 = sphi 0, %s484
      %s488 = sphi 0, %s487
      %s504 = sphi 0, %s488
    $region4: #{tpu_custom_call.1} parent=1 // loop_header_branch
      %43 = sbr.rel (%p41) target = $region8
    $region5: #{tpu_custom_call.1} parent=1 // loop_body
      %s45 = ssub.s32 %s40, 1
      %s46 = ssub.s32 %s40, 2
      %s53 = sadd.s32 1, %s48
      %p54 = scmp.ge.s32.totalorder %s53, 2
      %s55 = scalar_select %p54, 0, %s53
      %s56 = sadd.s32 1, %s47
      %s57 = scalar_select %p54, %s56, %s47
      %p58 = scmp.ge.s32.totalorder %s57, 2
      %s59 = scalar_select %p58, 0, %s57
      %s60 = ssub.s32 %s47, %s59
      %p61 = scmp.eq.s32.totalorder %s60, 0
      %s63 = sadd.s32 %s62, 1
      %s64 = scalar_select %p61, %s62, %s63
      %p67 = pneg %p61
      %p68 = scmp.eq.s32.totalorder %s40, 3
      %p69 = por %p67, %p68
      %p70 = scmp.ne.s32.totalorder %s62, %s65
      %p71 = scmp.eq.s32.totalorder %s40, 0
      %p72 = por %p70, %p71
      %p73 = scmp.ne.s32.totalorder %s62, %s65
      %p74 = scmp.eq.s32.totalorder %s45, 3
      %p75 = por %p73, %p74
      %p76 = scmp.ne.s32.totalorder %s65, %s66
      %p77 = scmp.eq.s32.totalorder %s45, 0
      %p78 = por %p76, %p77
      %p79 = scmp.ne.s32.totalorder %s65, %s66
      %p80 = scmp.eq.s32.totalorder %s46, 3
      %p81 = por %p79, %p80
      %p83 = scmp.ne.s32.totalorder %s66, %s82
      %p84 = scmp.eq.s32.totalorder %s46, 0
      %p85 = por %p83, %p84
      %s87 = sadd.s32 %s86, 1
      %p90 = scmp.eq.s32.totalorder %s40, 3
      %p91 = scmp.ne.s32.totalorder %s86, %s88
      %p92 = scmp.eq.s32.totalorder %s40, 0
      %p93 = por %p91, %p92
      %p94 = scmp.ne.s32.totalorder %s86, %s88
      %p95 = scmp.eq.s32.totalorder %s45, 3
      %p96 = por %p94, %p95
      %p97 = scmp.ne.s32.totalorder %s88, %s89
      %p98 = scmp.eq.s32.totalorder %s45, 0
      %p99 = por %p97, %p98
      %p100 = scmp.ne.s32.totalorder %s88, %s89
      %p101 = scmp.eq.s32.totalorder %s46, 3
      %p102 = por %p100, %p101
      %p104 = scmp.ne.s32.totalorder %s89, %s103
      %p105 = scmp.eq.s32.totalorder %s46, 0
      %p106 = por %p104, %p105
      %s108 = sadd.s32 %s107, 1
      %p111 = scmp.eq.s32.totalorder %s40, 3
      %p112 = scmp.ne.s32.totalorder %s107, %s109
      %p113 = scmp.eq.s32.totalorder %s40, 0
      %p114 = por %p112, %p113
      %p115 = scmp.ne.s32.totalorder %s107, %s109
      %p116 = scmp.eq.s32.totalorder %s45, 3
      %p117 = por %p115, %p116
      %p118 = scmp.ne.s32.totalorder %s109, %s110
      %p119 = scmp.eq.s32.totalorder %s45, 0
      %p120 = por %p118, %p119
      %p121 = scmp.ne.s32.totalorder %s109, %s110
      %p122 = scmp.eq.s32.totalorder %s46, 3
      %p123 = por %p121, %p122
      %p125 = scmp.ne.s32.totalorder %s110, %s124
      %p126 = scmp.eq.s32.totalorder %s46, 0
      %p127 = por %p125, %p126
      %s129 = sadd.s32 %s128, 1
      %p132 = scmp.eq.s32.totalorder %s40, 3
      %p133 = scmp.ne.s32.totalorder %s128, %s130
      %p134 = scmp.eq.s32.totalorder %s40, 0
      %p135 = por %p133, %p134
      %p136 = scmp.ne.s32.totalorder %s128, %s130
      %p137 = scmp.eq.s32.totalorder %s45, 3
      %p138 = por %p136, %p137
      %p139 = scmp.ne.s32.totalorder %s130, %s131
      %p140 = scmp.eq.s32.totalorder %s45, 0
      %p141 = por %p139, %p140
      %p142 = scmp.ne.s32.totalorder %s130, %s131
      %p143 = scmp.eq.s32.totalorder %s46, 3
      %p144 = por %p142, %p143
      %p146 = scmp.ne.s32.totalorder %s131, %s145
      %p147 = scmp.eq.s32.totalorder %s46, 0
      %p148 = por %p146, %p147
      %s150 = sadd.s32 %s149, 1
      %p153 = scmp.eq.s32.totalorder %s40, 3
      %p154 = scmp.ne.s32.totalorder %s149, %s151
      %p155 = scmp.eq.s32.totalorder %s40, 0
      %p156 = por %p154, %p155
      %p157 = scmp.ne.s32.totalorder %s149, %s151
      %p158 = scmp.eq.s32.totalorder %s45, 3
      %p159 = por %p157, %p158
      %p160 = scmp.ne.s32.totalorder %s151, %s152
      %p161 = scmp.eq.s32.totalorder %s45, 0
      %p162 = por %p160, %p161
      %p163 = scmp.ne.s32.totalorder %s151, %s152
      %p164 = scmp.eq.s32.totalorder %s46, 3
      %p165 = por %p163, %p164
      %p167 = scmp.ne.s32.totalorder %s152, %s166
      %p168 = scmp.eq.s32.totalorder %s46, 0
      %p169 = por %p167, %p168
      %s170 = ssub.s32 %s48, %s55
      %p171 = scmp.eq.s32.totalorder %s170, 0
      %s173 = sadd.s32 %s172, 1
      %s174 = scalar_select %p171, %s172, %s173
      %p177 = pneg %p171
      %p178 = scmp.eq.s32.totalorder %s40, 3
      %p179 = por %p177, %p178
      %p180 = scmp.ne.s32.totalorder %s172, %s175
      %p181 = scmp.eq.s32.totalorder %s40, 0
      %p182 = por %p180, %p181
      %p183 = scmp.ne.s32.totalorder %s172, %s175
      %p184 = scmp.eq.s32.totalorder %s45, 3
      %p185 = por %p183, %p184
      %p186 = scmp.ne.s32.totalorder %s175, %s176
      %p187 = scmp.eq.s32.totalorder %s45, 0
      %p188 = por %p186, %p187
      %p189 = scmp.ne.s32.totalorder %s175, %s176
      %p190 = scmp.eq.s32.totalorder %s46, 3
      %p191 = por %p189, %p190
      %p193 = scmp.ne.s32.totalorder %s176, %s192
      %p194 = scmp.eq.s32.totalorder %s46, 0
      %p195 = por %p193, %p194
      %s196 = ssub.s32 %s48, %s55
      %p197 = scmp.eq.s32.totalorder %s196, 0
      %s199 = sadd.s32 %s198, 1
      %s200 = scalar_select %p197, %s198, %s199
      %p203 = pneg %p197
      %p204 = scmp.eq.s32.totalorder %s40, 3
      %p205 = por %p203, %p204
      %p206 = scmp.ne.s32.totalorder %s198, %s201
      %p207 = scmp.eq.s32.totalorder %s40, 0
      %p208 = por %p206, %p207
      %p209 = scmp.ne.s32.totalorder %s198, %s201
      %p210 = scmp.eq.s32.totalorder %s45, 3
      %p211 = por %p209, %p210
      %p212 = scmp.ne.s32.totalorder %s201, %s202
      %p213 = scmp.eq.s32.totalorder %s45, 0
      %p214 = por %p212, %p213
      %p215 = scmp.ne.s32.totalorder %s201, %s202
      %p216 = scmp.eq.s32.totalorder %s46, 3
      %p217 = por %p215, %p216
      %p219 = scmp.ne.s32.totalorder %s202, %s218
      %p220 = scmp.eq.s32.totalorder %s46, 0
      %p221 = por %p219, %p220
      %s222 = ssub.s32 %s48, %s55
      %p223 = scmp.eq.s32.totalorder %s222, 0
      %s225 = sadd.s32 %s224, 1
      %s226 = scalar_select %p223, %s224, %s225
      %p229 = pneg %p223
      %p230 = scmp.eq.s32.totalorder %s40, 3
      %p231 = por %p229, %p230
      %p232 = scmp.ne.s32.totalorder %s224, %s227
      %p233 = scmp.eq.s32.totalorder %s40, 0
      %p234 = por %p232, %p233
      %p235 = scmp.ne.s32.totalorder %s224, %s227
      %p236 = scmp.eq.s32.totalorder %s45, 3
      %p237 = por %p235, %p236
      %p238 = scmp.ne.s32.totalorder %s227, %s228
      %p239 = scmp.eq.s32.totalorder %s45, 0
      %p240 = por %p238, %p239
      %p241 = scmp.ne.s32.totalorder %s227, %s228
      %p242 = scmp.eq.s32.totalorder %s46, 3
      %p243 = por %p241, %p242
      %p245 = scmp.ne.s32.totalorder %s228, %s244
      %p246 = scmp.eq.s32.totalorder %s46, 0
      %p247 = por %p245, %p246
      %s248 = ssub.s32 %s48, %s55
      %p249 = scmp.eq.s32.totalorder %s248, 0
      %s251 = sadd.s32 %s250, 1
      %s252 = scalar_select %p249, %s250, %s251
      %p255 = pneg %p249
      %p256 = scmp.eq.s32.totalorder %s40, 3
      %p257 = por %p255, %p256
      %p258 = scmp.ne.s32.totalorder %s250, %s253
      %p259 = scmp.eq.s32.totalorder %s40, 0
      %p260 = por %p258, %p259
      %p261 = scmp.ne.s32.totalorder %s250, %s253
      %p262 = scmp.eq.s32.totalorder %s45, 3
      %p263 = por %p261, %p262
      %p264 = scmp.ne.s32.totalorder %s253, %s254
      %p265 = scmp.eq.s32.totalorder %s45, 0
      %p266 = por %p264, %p265
      %p267 = scmp.ne.s32.totalorder %s253, %s254
      %p268 = scmp.eq.s32.totalorder %s46, 3
      %p269 = por %p267, %p268
      %p271 = scmp.ne.s32.totalorder %s254, %s270
      %p272 = scmp.eq.s32.totalorder %s46, 0
      %p273 = por %p271, %p272
      %s274 = ssub.s32 %s48, %s55
      %p275 = scmp.eq.s32.totalorder %s274, 0
      %s277 = sadd.s32 %s276, 1
      %s278 = scalar_select %p275, %s276, %s277
      %p281 = pneg %p275
      %p282 = scmp.eq.s32.totalorder %s40, 3
      %p283 = por %p281, %p282
      %p284 = scmp.ne.s32.totalorder %s276, %s279
      %p285 = scmp.eq.s32.totalorder %s40, 0
      %p286 = por %p284, %p285
      %p287 = scmp.ne.s32.totalorder %s276, %s279
      %p288 = scmp.eq.s32.totalorder %s45, 3
      %p289 = por %p287, %p288
      %p290 = scmp.ne.s32.totalorder %s279, %s280
      %p291 = scmp.eq.s32.totalorder %s45, 0
      %p292 = por %p290, %p291
      %p293 = scmp.ne.s32.totalorder %s279, %s280
      %p294 = scmp.eq.s32.totalorder %s46, 3
      %p295 = por %p293, %p294
      %p297 = scmp.ne.s32.totalorder %s280, %s296
      %p298 = scmp.eq.s32.totalorder %s46, 0
      %p299 = por %p297, %p298
      %s300 = ssub.s32 %s48, %s55
      %p301 = scmp.eq.s32.totalorder %s300, 0
      %s303 = sadd.s32 %s302, 1
      %s304 = scalar_select %p301, %s302, %s303
      %p307 = pneg %p301
      %p308 = scmp.eq.s32.totalorder %s40, 3
      %p309 = por %p307, %p308
      %p310 = scmp.ne.s32.totalorder %s302, %s305
      %p311 = scmp.eq.s32.totalorder %s40, 0
      %p312 = por %p310, %p311
      %p313 = scmp.ne.s32.totalorder %s302, %s305
      %p314 = scmp.eq.s32.totalorder %s45, 3
      %p315 = por %p313, %p314
      %p316 = scmp.ne.s32.totalorder %s305, %s306
      %p317 = scmp.eq.s32.totalorder %s45, 0
      %p318 = por %p316, %p317
      %p319 = scmp.ne.s32.totalorder %s305, %s306
      %p320 = scmp.eq.s32.totalorder %s46, 3
      %p321 = por %p319, %p320
      %p323 = scmp.ne.s32.totalorder %s306, %s322
      %p324 = scmp.eq.s32.totalorder %s46, 0
      %p325 = por %p323, %p324
      %s326 = ssub.s32 %s48, %s55
      %p327 = scmp.eq.s32.totalorder %s326, 0
      %s329 = sadd.s32 %s328, 1
      %s330 = scalar_select %p327, %s328, %s329
      %p333 = pneg %p327
      %p334 = scmp.eq.s32.totalorder %s40, 3
      %p335 = por %p333, %p334
      %p336 = scmp.ne.s32.totalorder %s328, %s331
      %p337 = scmp.eq.s32.totalorder %s40, 0
      %p338 = por %p336, %p337
      %p339 = scmp.ne.s32.totalorder %s328, %s331
      %p340 = scmp.eq.s32.totalorder %s45, 3
      %p341 = por %p339, %p340
      %p342 = scmp.ne.s32.totalorder %s331, %s332
      %p343 = scmp.eq.s32.totalorder %s45, 0
      %p344 = por %p342, %p343
      %p345 = scmp.ne.s32.totalorder %s331, %s332
      %p346 = scmp.eq.s32.totalorder %s46, 3
      %p347 = por %p345, %p346
      %p349 = scmp.ne.s32.totalorder %s332, %s348
      %p350 = scmp.eq.s32.totalorder %s46, 0
      %p351 = por %p349, %p350
      %s352 = ssub.s32 %s48, %s55
      %p353 = scmp.eq.s32.totalorder %s352, 0
      %s355 = sadd.s32 %s354, 1
      %s356 = scalar_select %p353, %s354, %s355
      %p359 = pneg %p353
      %p360 = scmp.eq.s32.totalorder %s40, 3
      %p361 = por %p359, %p360
      %p362 = scmp.ne.s32.totalorder %s354, %s357
      %p363 = scmp.eq.s32.totalorder %s40, 0
      %p364 = por %p362, %p363
      %p365 = scmp.ne.s32.totalorder %s354, %s357
      %p366 = scmp.eq.s32.totalorder %s45, 3
      %p367 = por %p365, %p366
      %p368 = scmp.ne.s32.totalorder %s357, %s358
      %p369 = scmp.eq.s32.totalorder %s45, 0
      %p370 = por %p368, %p369
      %p371 = scmp.ne.s32.totalorder %s357, %s358
      %p372 = scmp.eq.s32.totalorder %s46, 3
      %p373 = por %p371, %p372
      %p375 = scmp.ne.s32.totalorder %s358, %s374
      %p376 = scmp.eq.s32.totalorder %s46, 0
      %p377 = por %p375, %p376
      %s378 = ssub.s32 %s48, %s55
      %p379 = scmp.eq.s32.totalorder %s378, 0
      %s381 = sadd.s32 %s380, 1
      %s382 = scalar_select %p379, %s380, %s381
      %p385 = pneg %p379
      %p386 = scmp.eq.s32.totalorder %s40, 3
      %p387 = por %p385, %p386
      %p388 = scmp.ne.s32.totalorder %s380, %s383
      %p389 = scmp.eq.s32.totalorder %s40, 0
      %p390 = por %p388, %p389
      %p391 = scmp.ne.s32.totalorder %s380, %s383
      %p392 = scmp.eq.s32.totalorder %s45, 3
      %p393 = por %p391, %p392
      %p394 = scmp.ne.s32.totalorder %s383, %s384
      %p395 = scmp.eq.s32.totalorder %s45, 0
      %p396 = por %p394, %p395
      %p397 = scmp.ne.s32.totalorder %s383, %s384
      %p398 = scmp.eq.s32.totalorder %s46, 3
      %p399 = por %p397, %p398
      %p401 = scmp.ne.s32.totalorder %s384, %s400
      %p402 = scmp.eq.s32.totalorder %s46, 0
      %p403 = por %p401, %p402
      %s404 = ssub.s32 %s48, %s55
      %p405 = scmp.eq.s32.totalorder %s404, 0
      %s407 = sadd.s32 %s406, 1
      %s408 = scalar_select %p405, %s406, %s407
      %p411 = pneg %p405
      %p412 = scmp.eq.s32.totalorder %s40, 3
      %p413 = por %p411, %p412
      %p414 = scmp.ne.s32.totalorder %s406, %s409
      %p415 = scmp.eq.s32.totalorder %s40, 0
      %p416 = por %p414, %p415
      %p417 = scmp.ne.s32.totalorder %s406, %s409
      %p418 = scmp.eq.s32.totalorder %s45, 3
      %p419 = por %p417, %p418
      %p420 = scmp.ne.s32.totalorder %s409, %s410
      %p421 = scmp.eq.s32.totalorder %s45, 0
      %p422 = por %p420, %p421
      %p423 = scmp.ne.s32.totalorder %s409, %s410
      %p424 = scmp.eq.s32.totalorder %s46, 3
      %p425 = por %p423, %p424
      %p427 = scmp.ne.s32.totalorder %s410, %s426
      %p428 = scmp.eq.s32.totalorder %s46, 0
      %p429 = por %p427, %p428
      %s430 = ssub.s32 %s48, %s55
      %p431 = scmp.eq.s32.totalorder %s430, 0
      %s433 = sadd.s32 %s432, 1
      %s434 = scalar_select %p431, %s432, %s433
      %p437 = pneg %p431
      %p438 = scmp.eq.s32.totalorder %s40, 3
      %p439 = por %p437, %p438
      %p440 = scmp.ne.s32.totalorder %s432, %s435
      %p441 = scmp.eq.s32.totalorder %s40, 0
      %p442 = por %p440, %p441
      %p443 = scmp.ne.s32.totalorder %s432, %s435
      %p444 = scmp.eq.s32.totalorder %s45, 3
      %p445 = por %p443, %p444
      %p446 = scmp.ne.s32.totalorder %s435, %s436
      %p447 = scmp.eq.s32.totalorder %s45, 0
      %p448 = por %p446, %p447
      %p449 = scmp.ne.s32.totalorder %s435, %s436
      %p450 = scmp.eq.s32.totalorder %s46, 3
      %p451 = por %p449, %p450
      %p453 = scmp.ne.s32.totalorder %s436, %s452
      %p454 = scmp.eq.s32.totalorder %s46, 0
      %p455 = por %p453, %p454
      %s456 = ssub.s32 %s48, %s55
      %p457 = scmp.eq.s32.totalorder %s456, 0
      %s459 = sadd.s32 %s458, 1
      %s460 = scalar_select %p457, %s458, %s459
      %p463 = pneg %p457
      %p464 = scmp.eq.s32.totalorder %s40, 3
      %p465 = por %p463, %p464
      %p466 = scmp.ne.s32.totalorder %s458, %s461
      %p467 = scmp.eq.s32.totalorder %s40, 0
      %p468 = por %p466, %p467
      %p469 = scmp.ne.s32.totalorder %s458, %s461
      %p470 = scmp.eq.s32.totalorder %s45, 3
      %p471 = por %p469, %p470
      %p472 = scmp.ne.s32.totalorder %s461, %s462
      %p473 = scmp.eq.s32.totalorder %s45, 0
      %p474 = por %p472, %p473
      %p475 = scmp.ne.s32.totalorder %s461, %s462
      %p476 = scmp.eq.s32.totalorder %s46, 3
      %p477 = por %p475, %p476
      %p479 = scmp.ne.s32.totalorder %s462, %s478
      %p480 = scmp.eq.s32.totalorder %s46, 0
      %p481 = por %p479, %p480
      %s482 = ssub.s32 %s47, %s59
      %p483 = scmp.eq.s32.totalorder %s482, 0
      %s485 = sadd.s32 %s484, 1
      %s486 = scalar_select %p483, %s484, %s485
      %p489 = pneg %p483
      %p490 = scmp.eq.s32.totalorder %s40, 3
      %p491 = por %p489, %p490
      %p492 = scmp.ne.s32.totalorder %s484, %s487
      %p493 = scmp.eq.s32.totalorder %s40, 0
      %p494 = por %p492, %p493
      %p495 = scmp.ne.s32.totalorder %s484, %s487
      %p496 = scmp.eq.s32.totalorder %s45, 3
      %p497 = por %p495, %p496
      %p498 = scmp.ne.s32.totalorder %s487, %s488
      %p499 = scmp.eq.s32.totalorder %s45, 0
      %p500 = por %p498, %p499
      %p501 = scmp.ne.s32.totalorder %s487, %s488
      %p502 = scmp.eq.s32.totalorder %s46, 3
      %p503 = por %p501, %p502
      %p505 = scmp.ne.s32.totalorder %s488, %s504
      %p506 = scmp.eq.s32.totalorder %s46, 0
      %p507 = por %p505, %p506
      %p508 = scmp.le.s32.totalorder 1, %s40
      %p509 = scmp.lt.s32.totalorder %s40, 5
      %p510 = pnand %p508, %p509
      %p511 = pneg %p510
      // Predicated region
      $region9: #{tpu_custom_call.1} parent=5 // pred_check
        _
      $region10: #{tpu_custom_call.1} parent=5 // pred_check_branch
        %513 = sbr.rel (%p510) target = $region12
      $region11: #{tpu_custom_call.1} parent=5 // pred_region
        %s514 = ssub.s32 %s40, 1
        // Predicated region
        $region13: #{tpu_custom_call.1} parent=11 // pred_check
          %p515 = pneg %p99
        $region14: #{tpu_custom_call.1} parent=11 // pred_check_branch
          %517 = sbr.rel (%p515) target = $region16
        $region15: #{tpu_custom_call.1} parent=11 // pred_region
          _
        $region16: #{tpu_custom_call.1} parent=11 // pred_fallthru
          _
        // Predicated region
        $region17: #{tpu_custom_call.1} parent=11 // pred_check
          %p518 = pneg %p120
        $region18: #{tpu_custom_call.1} parent=11 // pred_check_branch
          %520 = sbr.rel (%p518) target = $region20
        $region19: #{tpu_custom_call.1} parent=11 // pred_region
          %s522 = ssub.s32 128, 128
          %523 = vsyncadd [#allocation4], %s522
          %s525 = sshll.u32 [#allocation3], 4
          %s526 = int_to_ptr.vmem [resolvable:$true] %s525
          %528 = dma.hbm_to_vmem [thread:$0]  %s2, 128, %s526, [#allocation4]
        $region20: #{tpu_custom_call.1} parent=11 // pred_fallthru
          _
        // Predicated region
        $region21: #{tpu_custom_call.1} parent=11 // pred_check
          %p529 = pneg %p141
        $region22: #{tpu_custom_call.1} parent=11 // pred_check_branch
          %531 = sbr.rel (%p529) target = $region24
        $region23: #{tpu_custom_call.1} parent=11 // pred_region
          %s533 = ssub.s32 128, 128
          %534 = vsyncadd [#allocation7], %s533
          %s536 = sshll.u32 [#allocation6], 4
          %s537 = int_to_ptr.vmem [resolvable:$true] %s536
          %539 = dma.hbm_to_vmem [thread:$0]  %s3, 128, %s537, [#allocation7]
        $region24: #{tpu_custom_call.1} parent=11 // pred_fallthru
          _
        // Predicated region
        $region25: #{tpu_custom_call.1} parent=11 // pred_check
          %p540 = pneg %p162
        $region26: #{tpu_custom_call.1} parent=11 // pred_check_branch
          %542 = sbr.rel (%p540) target = $region28
        $region27: #{tpu_custom_call.1} parent=11 // pred_region
          %s544 = ssub.s32 128, 128
          %545 = vsyncadd [#allocation7], %s544
          %s547 = sshll.u32 [#allocation8], 4
          %s548 = int_to_ptr.vmem [resolvable:$true] %s547
          %550 = dma.hbm_to_vmem [thread:$0]  %s4, 128, %s548, [#allocation7]
        $region28: #{tpu_custom_call.1} parent=11 // pred_fallthru
          _
      $region12: #{tpu_custom_call.1} parent=5 // pred_fallthru
        _
      %p551 = scmp.lt.s32.totalorder %s40, 4
      // Predicated region
      $region29: #{tpu_custom_call.1} parent=5 // pred_check
        %p552 = pneg %p551
      $region30: #{tpu_custom_call.1} parent=5 // pred_check_branch
        %554 = sbr.rel (%p552) target = $region32
      $region31: #{tpu_custom_call.1} parent=5 // pred_region
        // Predicated region
        $region33: #{tpu_custom_call.1} parent=31 // pred_check
          %p555 = pneg %p72
        $region34: #{tpu_custom_call.1} parent=31 // pred_check_branch
          %557 = sbr.rel (%p555) target = $region36
        $region35: #{tpu_custom_call.1} parent=31 // pred_region
          %p558 = scmp.lt.s32.totalorder %s47, 1
          %s559 = scalar_select %p558, %s47, 1
          %s560 = smul.addr %s559, 8
          %s561 = scalar_lea.vmem %s0, %s560
        $region36: #{tpu_custom_call.1} parent=31 // pred_fallthru
          _
        // Predicated region
        $region37: #{tpu_custom_call.1} parent=31 // pred_check
          %p562 = pneg %p182
        $region38: #{tpu_custom_call.1} parent=31 // pred_check_branch
          %564 = sbr.rel (%p562) target = $region40
        $region39: #{tpu_custom_call.1} parent=31 // pred_region
          %s565 = sand.u32 %s40, 1
          %s566 = scalar_lea.sflag [#allocation10], %s565
          %s567 = sand.u32 %s172, 1
          %s568 = scalar_lea.vmem [#allocation9], %s567
          %s570 = ssub.s32 16, 16
          %571 = vsyncadd %s566, %s570
          %s572 = smul.addr %s48, 16
          %s573 = scalar_lea.hbm %s5, %s572
          %s575 = sshll.u32 %s568, 4
          %s576 = int_to_ptr.vmem [resolvable:$true] %s575
          %578 = dma.hbm_to_vmem [thread:$0]  %s573, 16, %s576, %s566
        $region40: #{tpu_custom_call.1} parent=31 // pred_fallthru
          _
        // Predicated region
        $region41: #{tpu_custom_call.1} parent=31 // pred_check
          %p579 = pneg %p208
        $region42: #{tpu_custom_call.1} parent=31 // pred_check_branch
          %581 = sbr.rel (%p579) target = $region44
        $region43: #{tpu_custom_call.1} parent=31 // pred_region
          %s582 = sand.u32 %s40, 1
          %s583 = scalar_lea.sflag [#allocation10], %s582
          %s584 = sand.u32 %s198, 1
          %s585 = scalar_lea.vmem [#allocation11], %s584
          %s587 = ssub.s32 16, 16
          %588 = vsyncadd %s583, %s587
          %s589 = smul.addr %s48, 16
          %s590 = scalar_lea.hbm %s6, %s589
          %s592 = sshll.u32 %s585, 4
          %s593 = int_to_ptr.vmem [resolvable:$true] %s592
          %595 = dma.hbm_to_vmem [thread:$0]  %s590, 16, %s593, %s583
        $region44: #{tpu_custom_call.1} parent=31 // pred_fallthru
          _
        // Predicated region
        $region45: #{tpu_custom_call.1} parent=31 // pred_check
          %p596 = pneg %p234
        $region46: #{tpu_custom_call.1} parent=31 // pred_check_branch
          %598 = sbr.rel (%p596) target = $region48
        $region47: #{tpu_custom_call.1} parent=31 // pred_region
          %p599 = scmp.lt.s32.totalorder %s48, 1
          %s600 = scalar_select %p599, %s48, 1
          %s601 = smul.addr %s600, 8
          %s602 = smul.addr %s601, 4
          %s603 = scalar_lea.vmem %s7, %s602
        $region48: #{tpu_custom_call.1} parent=31 // pred_fallthru
          _
        // Predicated region
        $region49: #{tpu_custom_call.1} parent=31 // pred_check
          %p604 = pneg %p260
        $region50: #{tpu_custom_call.1} parent=31 // pred_check_branch
          %606 = sbr.rel (%p604) target = $region52
        $region51: #{tpu_custom_call.1} parent=31 // pred_region
          %s607 = sand.u32 %s40, 1
          %s608 = scalar_lea.sflag [#allocation13], %s607
          %s609 = sand.u32 %s250, 1
          %s610 = scalar_lea.vmem [#allocation12], %s609
          %s612 = ssub.s32 16, 16
          %613 = vsyncadd %s608, %s612
          %s614 = smul.addr %s48, 16
          %s615 = scalar_lea.hbm %s8, %s614
          %s617 = sshll.u32 %s610, 4
          %s618 = int_to_ptr.vmem [resolvable:$true] %s617
          %620 = dma.hbm_to_vmem [thread:$0]  %s615, 16, %s618, %s608
        $region52: #{tpu_custom_call.1} parent=31 // pred_fallthru
          _
        // Predicated region
        $region53: #{tpu_custom_call.1} parent=31 // pred_check
          %p621 = pneg %p286
        $region54: #{tpu_custom_call.1} parent=31 // pred_check_branch
          %623 = sbr.rel (%p621) target = $region56
        $region55: #{tpu_custom_call.1} parent=31 // pred_region
          %s624 = sand.u32 %s40, 1
          %s625 = scalar_lea.sflag [#allocation13], %s624
          %s626 = sand.u32 %s276, 1
          %s627 = scalar_lea.vmem [#allocation14], %s626
          %s629 = ssub.s32 16, 16
          %630 = vsyncadd %s625, %s629
          %s631 = smul.addr %s48, 16
          %s632 = scalar_lea.hbm %s9, %s631
          %s634 = sshll.u32 %s627, 4
          %s635 = int_to_ptr.vmem [resolvable:$true] %s634
          %637 = dma.hbm_to_vmem [thread:$0]  %s632, 16, %s635, %s625
        $region56: #{tpu_custom_call.1} parent=31 // pred_fallthru
          _
        // Predicated region
        $region57: #{tpu_custom_call.1} parent=31 // pred_check
          %p638 = pneg %p312
        $region58: #{tpu_custom_call.1} parent=31 // pred_check_branch
          %640 = sbr.rel (%p638) target = $region60
        $region59: #{tpu_custom_call.1} parent=31 // pred_region
          %p641 = scmp.lt.s32.totalorder %s48, 1
          %s642 = scalar_select %p641, %s48, 1
          %s643 = smul.addr %s642, 4
          %s644 = smul.addr %s643, 4
          %s645 = scalar_lea.vmem %s10, %s644
        $region60: #{tpu_custom_call.1} parent=31 // pred_fallthru
          _
        // Predicated region
        $region61: #{tpu_custom_call.1} parent=31 // pred_check
          %p646 = pneg %p338
        $region62: #{tpu_custom_call.1} parent=31 // pred_check_branch
          %648 = sbr.rel (%p646) target = $region64
        $region63: #{tpu_custom_call.1} parent=31 // pred_region
          %s649 = sand.u32 %s40, 1
          %s650 = scalar_lea.sflag [#allocation16], %s649
          %s651 = sand.u32 %s328, 1
          %s652 = scalar_lea.vmem [#allocation15], %s651
          %s654 = ssub.s32 16, 16
          %655 = vsyncadd %s650, %s654
          %s656 = smul.addr %s48, 16
          %s657 = scalar_lea.hbm %s11, %s656
          %s659 = sshll.u32 %s652, 4
          %s660 = int_to_ptr.vmem [resolvable:$true] %s659
          %662 = dma.hbm_to_vmem [thread:$0]  %s657, 16, %s660, %s650
        $region64: #{tpu_custom_call.1} parent=31 // pred_fallthru
          _
        // Predicated region
        $region65: #{tpu_custom_call.1} parent=31 // pred_check
          %p663 = pneg %p364
        $region66: #{tpu_custom_call.1} parent=31 // pred_check_branch
          %665 = sbr.rel (%p663) target = $region68
        $region67: #{tpu_custom_call.1} parent=31 // pred_region
          %s666 = sand.u32 %s40, 1
          %s667 = scalar_lea.sflag [#allocation16], %s666
          %s668 = sand.u32 %s354, 1
          %s669 = scalar_lea.vmem [#allocation17], %s668
          %s671 = ssub.s32 16, 16
          %672 = vsyncadd %s667, %s671
          %s673 = smul.addr %s48, 16
          %s674 = scalar_lea.hbm %s12, %s673
          %s676 = sshll.u32 %s669, 4
          %s677 = int_to_ptr.vmem [resolvable:$true] %s676
          %679 = dma.hbm_to_vmem [thread:$0]  %s674, 16, %s677, %s667
        $region68: #{tpu_custom_call.1} parent=31 // pred_fallthru
          _
        // Predicated region
        $region69: #{tpu_custom_call.1} parent=31 // pred_check
          %p680 = pneg %p390
        $region70: #{tpu_custom_call.1} parent=31 // pred_check_branch
          %682 = sbr.rel (%p680) target = $region72
        $region71: #{tpu_custom_call.1} parent=31 // pred_region
          %s683 = sand.u32 %s40, 1
          %s684 = scalar_lea.sflag [#allocation19], %s683
          %s685 = sand.u32 %s380, 1
          %s686 = smul.addr %s685, 16
          %s687 = scalar_lea.vmem [#allocation18], %s686
          %s689 = ssub.s32 256, 256
          %690 = vsyncadd %s684, %s689
          %s691 = smul.addr %s48, 4
          %s692 = smul.addr %s691, 64
          %s693 = scalar_lea.hbm %s13, %s692
          %s694 = sshll.u32 %s687, 4
          %s695 = int_to_ptr.vmem [resolvable:$true] %s694
          %700 = dma.hbm_to_vmem [thread:$0]  %s693, 256, %s695, %s684, 64, 64, 4
        $region72: #{tpu_custom_call.1} parent=31 // pred_fallthru
          _
        // Predicated region
        $region73: #{tpu_custom_call.1} parent=31 // pred_check
          %p701 = pneg %p416
        $region74: #{tpu_custom_call.1} parent=31 // pred_check_branch
          %703 = sbr.rel (%p701) target = $region76
        $region75: #{tpu_custom_call.1} parent=31 // pred_region
          %s704 = sand.u32 %s40, 1
          %s705 = scalar_lea.sflag [#allocation19], %s704
          %s706 = sand.u32 %s406, 1
          %s707 = scalar_lea.vmem [#allocation20], %s706
          %s709 = ssub.s32 16, 16
          %710 = vsyncadd %s705, %s709
          %s711 = smul.addr %s48, 16
          %s712 = scalar_lea.hbm %s14, %s711
          %s714 = sshll.u32 %s707, 4
          %s715 = int_to_ptr.vmem [resolvable:$true] %s714
          %717 = dma.hbm_to_vmem [thread:$0]  %s712, 16, %s715, %s705
        $region76: #{tpu_custom_call.1} parent=31 // pred_fallthru
          _
        // Predicated region
        $region77: #{tpu_custom_call.1} parent=31 // pred_check
          %p718 = pneg %p442
        $region78: #{tpu_custom_call.1} parent=31 // pred_check_branch
          %720 = sbr.rel (%p718) target = $region80
        $region79: #{tpu_custom_call.1} parent=31 // pred_region
          %p721 = scmp.lt.s32.totalorder %s48, 1
          %s722 = scalar_select %p721, %s48, 1
          %s723 = smul.addr %s722, 8
          %s724 = smul.addr %s723, 4
          %s725 = scalar_lea.vmem %s15, %s724
        $region80: #{tpu_custom_call.1} parent=31 // pred_fallthru
          _
        // Predicated region
        $region81: #{tpu_custom_call.1} parent=31 // pred_check
          %p726 = pneg %p468
        $region82: #{tpu_custom_call.1} parent=31 // pred_check_branch
          %728 = sbr.rel (%p726) target = $region84
        $region83: #{tpu_custom_call.1} parent=31 // pred_region
          %p729 = scmp.lt.s32.totalorder %s48, 1
          %s730 = scalar_select %p729, %s48, 1
          %s731 = scalar_lea.vmem %s16, %s730
        $region84: #{tpu_custom_call.1} parent=31 // pred_fallthru
          _
      $region32: #{tpu_custom_call.1} parent=5 // pred_fallthru
        _
      %p732 = scmp.le.s32.totalorder 1, %s40
      %p733 = scmp.lt.s32.totalorder %s40, 5
      %p734 = pnand %p732, %p733
      %p735 = pneg %p734
      // Predicated region
      $region85: #{tpu_custom_call.1} parent=5 // pred_check
        _
      $region86: #{tpu_custom_call.1} parent=5 // pred_check_branch
        %737 = sbr.rel (%p734) target = $region88
      $region87: #{tpu_custom_call.1} parent=5 // pred_region
        %s738 = ssub.s32 %s40, 1
        // Predicated region
        $region89: #{tpu_custom_call.1} parent=87 // pred_check
          %p739 = pneg %p120
        $region90: #{tpu_custom_call.1} parent=87 // pred_check_branch
          %741 = sbr.rel (%p739) target = $region92
        $region91: #{tpu_custom_call.1} parent=87 // pred_region
          %742 = dma.done [#allocation4], 128
        $region92: #{tpu_custom_call.1} parent=87 // pred_fallthru
          _
        // Predicated region
        $region93: #{tpu_custom_call.1} parent=87 // pred_check
          %p743 = pneg %p141
        $region94: #{tpu_custom_call.1} parent=87 // pred_check_branch
          %745 = sbr.rel (%p743) target = $region96
        $region95: #{tpu_custom_call.1} parent=87 // pred_region
          %746 = dma.done [#allocation7], 128
        $region96: #{tpu_custom_call.1} parent=87 // pred_fallthru
          _
        // Predicated region
        $region97: #{tpu_custom_call.1} parent=87 // pred_check
          %p747 = pneg %p162
        $region98: #{tpu_custom_call.1} parent=87 // pred_check_branch
          %749 = sbr.rel (%p747) target = $region100
        $region99: #{tpu_custom_call.1} parent=87 // pred_region
          %750 = dma.done [#allocation7], 128
        $region100: #{tpu_custom_call.1} parent=87 // pred_fallthru
          _
        %s751 = sand.u32 %s45, 1
        %s752 = scalar_lea.sflag [#allocation10], %s751
        %s753 = sand.u32 %s175, 1
        %s754 = scalar_lea.vmem [#allocation9], %s753
        // Predicated region
        $region101: #{tpu_custom_call.1} parent=87 // pred_check
          %p755 = pneg %p188
        $region102: #{tpu_custom_call.1} parent=87 // pred_check_branch
          %757 = sbr.rel (%p755) target = $region104
        $region103: #{tpu_custom_call.1} parent=87 // pred_region
          %758 = dma.done %s752, 16
        $region104: #{tpu_custom_call.1} parent=87 // pred_fallthru
          _
        %s759 = sand.u32 %s45, 1
        %s760 = scalar_lea.sflag [#allocation10], %s759
        %s761 = sand.u32 %s201, 1
        %s762 = scalar_lea.vmem [#allocation11], %s761
        // Predicated region
        $region105: #{tpu_custom_call.1} parent=87 // pred_check
          %p763 = pneg %p214
        $region106: #{tpu_custom_call.1} parent=87 // pred_check_branch
          %765 = sbr.rel (%p763) target = $region108
        $region107: #{tpu_custom_call.1} parent=87 // pred_region
          %766 = dma.done %s760, 16
        $region108: #{tpu_custom_call.1} parent=87 // pred_fallthru
          _
        %s767 = sand.u32 %s45, 1
        %s768 = scalar_lea.sflag [#allocation13], %s767
        %s769 = sand.u32 %s253, 1
        %s770 = scalar_lea.vmem [#allocation12], %s769
        // Predicated region
        $region109: #{tpu_custom_call.1} parent=87 // pred_check
          %p771 = pneg %p266
        $region110: #{tpu_custom_call.1} parent=87 // pred_check_branch
          %773 = sbr.rel (%p771) target = $region112
        $region111: #{tpu_custom_call.1} parent=87 // pred_region
          %774 = dma.done %s768, 16
        $region112: #{tpu_custom_call.1} parent=87 // pred_fallthru
          _
        %s775 = sand.u32 %s45, 1
        %s776 = scalar_lea.sflag [#allocation13], %s775
        %s777 = sand.u32 %s279, 1
        %s778 = scalar_lea.vmem [#allocation14], %s777
        // Predicated region
        $region113: #{tpu_custom_call.1} parent=87 // pred_check
          %p779 = pneg %p292
        $region114: #{tpu_custom_call.1} parent=87 // pred_check_branch
          %781 = sbr.rel (%p779) target = $region116
        $region115: #{tpu_custom_call.1} parent=87 // pred_region
          %782 = dma.done %s776, 16
        $region116: #{tpu_custom_call.1} parent=87 // pred_fallthru
          _
        %s783 = sand.u32 %s45, 1
        %s784 = scalar_lea.sflag [#allocation16], %s783
        %s785 = sand.u32 %s331, 1
        %s786 = scalar_lea.vmem [#allocation15], %s785
        // Predicated region
        $region117: #{tpu_custom_call.1} parent=87 // pred_check
          %p787 = pneg %p344
        $region118: #{tpu_custom_call.1} parent=87 // pred_check_branch
          %789 = sbr.rel (%p787) target = $region120
        $region119: #{tpu_custom_call.1} parent=87 // pred_region
          %790 = dma.done %s784, 16
        $region120: #{tpu_custom_call.1} parent=87 // pred_fallthru
          _
        %s791 = sand.u32 %s45, 1
        %s792 = scalar_lea.sflag [#allocation16], %s791
        %s793 = sand.u32 %s357, 1
        %s794 = scalar_lea.vmem [#allocation17], %s793
        // Predicated region
        $region121: #{tpu_custom_call.1} parent=87 // pred_check
          %p795 = pneg %p370
        $region122: #{tpu_custom_call.1} parent=87 // pred_check_branch
          %797 = sbr.rel (%p795) target = $region124
        $region123: #{tpu_custom_call.1} parent=87 // pred_region
          %798 = dma.done %s792, 16
        $region124: #{tpu_custom_call.1} parent=87 // pred_fallthru
          _
        %s799 = sand.u32 %s45, 1
        %s800 = scalar_lea.sflag [#allocation19], %s799
        %s801 = sand.u32 %s383, 1
        %s802 = smul.addr %s801, 16
        %s803 = scalar_lea.vmem [#allocation18], %s802
        // Predicated region
        $region125: #{tpu_custom_call.1} parent=87 // pred_check
          %p804 = pneg %p396
        $region126: #{tpu_custom_call.1} parent=87 // pred_check_branch
          %806 = sbr.rel (%p804) target = $region128
        $region127: #{tpu_custom_call.1} parent=87 // pred_region
          %807 = dma.done %s800, 256
        $region128: #{tpu_custom_call.1} parent=87 // pred_fallthru
          _
        %s808 = sand.u32 %s45, 1
        %s809 = scalar_lea.sflag [#allocation19], %s808
        %s810 = sand.u32 %s409, 1
        %s811 = scalar_lea.vmem [#allocation20], %s810
        // Predicated region
        $region129: #{tpu_custom_call.1} parent=87 // pred_check
          %p812 = pneg %p422
        $region130: #{tpu_custom_call.1} parent=87 // pred_check_branch
          %814 = sbr.rel (%p812) target = $region132
        $region131: #{tpu_custom_call.1} parent=87 // pred_region
          %815 = dma.done %s809, 16
        $region132: #{tpu_custom_call.1} parent=87 // pred_fallthru
          _
        %p816 = scmp.lt.s32.totalorder %s49, 1
        %s817 = scalar_select %p816, %s49, 1
        %s818 = smul.addr %s817, 8
        %s819 = scalar_lea.vmem %s0, %s818
        %p820 = pneg %p78
        %p821 = pneg %p75
        %p822 = pneg %p99
        %p823 = pneg %p96
        %p824 = pneg %p120
        %p825 = pneg %p117
        %p826 = pneg %p141
        %p827 = pneg %p138
        %p828 = pneg %p162
        %p829 = pneg %p159
        %s830 = sand.u32 %s45, 1
        %s831 = scalar_lea.sflag [#allocation10], %s830
        %s832 = sand.u32 %s175, 1
        %s833 = scalar_lea.vmem [#allocation9], %s832
        %p834 = pneg %p188
        %p835 = pneg %p185
        %s836 = sand.u32 %s45, 1
        %s837 = scalar_lea.sflag [#allocation10], %s836
        %s838 = sand.u32 %s201, 1
        %s839 = scalar_lea.vmem [#allocation11], %s838
        %p840 = pneg %p214
        %p841 = pneg %p211
        %p842 = scmp.lt.s32.totalorder %s50, 1
        %s843 = scalar_select %p842, %s50, 1
        %s844 = smul.addr %s843, 8
        %s845 = smul.addr %s844, 4
        %s846 = scalar_lea.vmem %s7, %s845
        %p847 = pneg %p240
        %p848 = pneg %p237
        %s849 = sand.u32 %s45, 1
        %s850 = scalar_lea.sflag [#allocation13], %s849
        %s851 = sand.u32 %s253, 1
        %s852 = scalar_lea.vmem [#allocation12], %s851
        %p853 = pneg %p266
        %p854 = pneg %p263
        %s855 = sand.u32 %s45, 1
        %s856 = scalar_lea.sflag [#allocation13], %s855
        %s857 = sand.u32 %s279, 1
        %s858 = scalar_lea.vmem [#allocation14], %s857
        %p859 = pneg %p292
        %p860 = pneg %p289
        %p861 = scmp.lt.s32.totalorder %s50, 1
        %s862 = scalar_select %p861, %s50, 1
        %s863 = smul.addr %s862, 4
        %s864 = smul.addr %s863, 4
        %s865 = scalar_lea.vmem %s10, %s864
        %p866 = pneg %p318
        %p867 = pneg %p315
        %s868 = sand.u32 %s45, 1
        %s869 = scalar_lea.sflag [#allocation16], %s868
        %s870 = sand.u32 %s331, 1
        %s871 = scalar_lea.vmem [#allocation15], %s870
        %p872 = pneg %p344
        %p873 = pneg %p341
        %s874 = sand.u32 %s45, 1
        %s875 = scalar_lea.sflag [#allocation16], %s874
        %s876 = sand.u32 %s357, 1
        %s877 = scalar_lea.vmem [#allocation17], %s876
        %p878 = pneg %p370
        %p879 = pneg %p367
        %s880 = sand.u32 %s45, 1
        %s881 = scalar_lea.sflag [#allocation19], %s880
        %s882 = sand.u32 %s383, 1
        %s883 = smul.addr %s882, 16
        %s884 = scalar_lea.vmem [#allocation18], %s883
        %p885 = pneg %p396
        %p886 = pneg %p393
        %s887 = sand.u32 %s45, 1
        %s888 = scalar_lea.sflag [#allocation19], %s887
        %s889 = sand.u32 %s409, 1
        %s890 = scalar_lea.vmem [#allocation20], %s889
        %p891 = pneg %p422
        %p892 = pneg %p419
        %p893 = scmp.lt.s32.totalorder %s50, 1
        %s894 = scalar_select %p893, %s50, 1
        %s895 = smul.addr %s894, 8
        %s896 = smul.addr %s895, 4
        %s897 = scalar_lea.vmem %s15, %s896
        %p898 = pneg %p448
        %p899 = pneg %p445
        %p900 = scmp.lt.s32.totalorder %s50, 1
        %s901 = scalar_select %p900, %s50, 1
        %s902 = scalar_lea.vmem %s16, %s901
        %p903 = pneg %p474
        %p904 = pneg %p471
        %p905 = pneg %p500
        %p906 = pneg %p497
        %s907 = sand.u32 %s487, 1
        %s908 = scalar_lea.sflag [#allocation5], %s907
        %s909 = sand.u32 %s487, 1
        %s910 = smul.addr %s909, 8
        %s911 = scalar_lea.vmem [#allocation21], %s910
        %p912 = scmp.lt.s32.totalorder %s49, 1
        %s913 = scalar_select %p912, %s49, 1
        %s914 = smul.addr %s913, 8
        %s915 = scalar_lea.vmem %s0, %s914
        %p916 = scmp.lt.s32.totalorder %s50, 1
        %s917 = scalar_select %p916, %s50, 1
        %s918 = smul.addr %s917, 8
        %s919 = smul.addr %s918, 4
        %s920 = scalar_lea.vmem %s7, %s919
        %p921 = scmp.lt.s32.totalorder %s50, 1
        %s922 = scalar_select %p921, %s50, 1
        %s923 = smul.addr %s922, 4
        %s924 = smul.addr %s923, 4
        %s925 = scalar_lea.vmem %s10, %s924
        %p926 = scmp.lt.s32.totalorder %s50, 1
        %s927 = scalar_select %p926, %s50, 1
        %s928 = smul.addr %s927, 8
        %s929 = smul.addr %s928, 4
        %s930 = scalar_lea.vmem %s15, %s929
        %p931 = scmp.lt.s32.totalorder %s50, 1
        %s932 = scalar_select %p931, %s50, 1
        %s933 = scalar_lea.vmem %s16, %s932
        %p935 = scmp.eq.s32.totalorder %s50, 0
        // Predicated region
        $region133: #{tpu_custom_call.1} parent=87 // pred_check
          %p936 = pneg %p935
        $region134: #{tpu_custom_call.1} parent=87 // pred_check_branch
          %938 = sbr.rel (%p936) target = $region136
        $region135: #{tpu_custom_call.1} parent=87 // pred_region
          %v939 = vld [vmem:[%s915] sm:$0xff]
          %vm940 = vcmask 261120
          %941 = vst.msk [vmem:[#allocation2] sm:$0xff] %vm940, %v939
        $region136: #{tpu_custom_call.1} parent=87 // pred_fallthru
          _
        %v942 = vld [vmem:[#allocation2] sm:$0xff]
        %vm943 = vcmask 261120
        %v944 = vsel %vm943, %v942, 0.0
        %945 = vadd.xlane.f32.xlu0 %v944
        %v946 = vpop.xlane.xlu0 %945
        %v947 = vrcp.pop 32.0
        %v948 = vmul.f32 %v946, %v947
        %v949 = vsub.f32 %v942, %v948
        %v950 = vmul.f32 %v949, %v949
        %v951 = vsel %vm943, %v950, 0.0
        %952 = vadd.xlane.f32.xlu0 %v951
        %v953 = vpop.xlane.xlu0 %952
        %v954 = vmul.f32 %v953, %v947
        %v955 = vadd.f32 %v954, 1e-05
        %v956 = vrsqrt.pop %v955
        %v957 = vmul.f32 %v949, %v956
        %v958 = vld [vmem:[%s754] sm:$0x1]
        %v960 = vlaneseq
        %v961 = vshrl.u32 %v960, 7
        %v962 = vsub.s32 0, %v961
        %v963 = vrot.slane %v958, %v962
        %v965 = vmul.f32 %v957, %v963
        %v966 = vld [vmem:[%s762] sm:$0x1]
        %v968 = vlaneseq
        %v969 = vshrl.u32 %v968, 7
        %v970 = vsub.s32 0, %v969
        %v971 = vrot.slane %v966, %v970
        %v973 = vadd.f32 %v965, %v971
        %v974 = vpack.c.bf16 %v973, %v973
        %v975 = vld [vmem:[%s920] sm:$0xff]
        %v976 = vld [vmem:[%s920 + $0x8] sm:$0xff]
        %v977 = vld [vmem:[%s920 + $0x10] sm:$0xff]
        %v978 = vld [vmem:[%s920 + $0x18] sm:$0xff]
        %v983 = vunpack.c.l.b16 %v975
        %v984 = vunpack.c.h.b16 %v975
        %v985 = vunpack.c.l.b16 %v976
        %v986 = vunpack.c.h.b16 %v976
        %v987 = vunpack.c.l.b16 %v977
        %v988 = vunpack.c.h.b16 %v977
        %v989 = vunpack.c.l.b16 %v978
        %v990 = vunpack.c.h.b16 %v978
        %v991 = vpack.c.b16 %v985, %v983
        %v992 = vpack.c.b16 %v986, %v984
        %v993 = vpack.c.b16 %v989, %v987
        %v994 = vpack.c.b16 %v990, %v988
        %v1000 = vsel %vm943, %v974, 0
        %1002 = vmatprep.subr.bf16.mxu0 %v992
        %1003 = vmatpush1.bf16.msra.mxu0 %v991
        %1004 = vmatprep.subr.bf16.mxu0 %v994
        %1005 = vmatpush1.bf16.msra.mxu0 %v993
        %1006 = vmatprep.subr.bf16.mxu0 0
        %1007 = vmatpush1.bf16.msra.mxu0 0
        %1008 = vmatprep.subr.bf16.mxu0 0
        %1009 = vmatpush1.bf16.msra.mxu0 0
        %1010 = vmatprep.subr.bf16.mxu0 0
        %1011 = vmatpush1.bf16.msra.mxu0 0
        %1012 = vmatprep.subr.bf16.mxu0 0
        %1013 = vmatpush1.bf16.msra.mxu0 0
        %1014 = vmatprep.subr.bf16.mxu0 0
        %1015 = vmatpush1.bf16.msra.mxu0 0
        %1016 = vmatprep.subr.bf16.mxu0 0
        %1017 = vmatpush1.bf16.msra.mxu0 0
        %1018 = vmatprep.subr.bf16.mxu0 0
        %1019 = vmatpush1.bf16.msra.mxu0 0
        %1020 = vmatprep.subr.bf16.mxu0 0
        %1021 = vmatpush1.bf16.msra.mxu0 0
        %1022 = vmatprep.subr.bf16.mxu0 0
        %1023 = vmatpush1.bf16.msra.mxu0 0
        %1024 = vmatprep.subr.bf16.mxu0 0
        %1025 = vmatpush1.bf16.msra.mxu0 0
        %1026 = vmatprep.subr.bf16.mxu0 0
        %1027 = vmatpush1.bf16.msra.mxu0 0
        %1028 = vmatprep.subr.bf16.mxu0 0
        %1029 = vmatpush1.bf16.msra.mxu0 0
        %1030 = vmatprep.subr.bf16.mxu0 0
        %1031 = vmatpush1.bf16.msra.mxu0 0
        %1032 = vmatprep.subr.bf16.mxu0 0
        %1033 = vmatpush1.bf16.msra.mxu0 0
        %1034 = vmatprep.mubr.bf16.mxu0 0
        %1035 = vmatmul.mubr.bf16.gmra.mrb[0].mxu0 %v1000
        %v1036 = vpop.f32.mrb[0].mxu0
        %v1037 = vadd.f32 0.0, %v1036
        %v1038 = vpop.f32.mrb[0].mxu0
        %v1039 = vadd.f32 0.0, %v1038
        %v1040 = vpop.f32.mrb[0].mxu0
        %v1041 = vpop.f32.mrb[0].mxu0
        %1042 = vdwg.mxu0
        %v1043 = vld [vmem:[%s1] sm:$0xff]
        %v1044 = vmul.f32 %v1037, %v1043
        %v1045 = vld [vmem:[#allocation3] sm:$0xff]
        %1047 = vrot.lane.b32.xlu0 %v1045, 32
        %v1048 = vpop.permute.xlu0 %1047
        %v1050 = vmul.f32 %v1037, %v1048
        %1052 = vrot.lane.b32.xlu0 %v1050, 96
        %v1053 = vpop.permute.xlu0 %1052
        %v1055 = vadd.f32 %v1044, %v1053
        %v1056 = vld [vmem:[#allocation6] sm:$0xff]
        %1058 = vrot.lane.b32.xlu0 %v1056, 64
        %v1059 = vpop.permute.xlu0 %1058
        %v1061 = vmul.f32 %v1037, %v1059
        %v1062 = vld [vmem:[#allocation8] sm:$0xff]
        %1064 = vrot.lane.b32.xlu0 %v1062, 96
        %v1065 = vpop.permute.xlu0 %1064
        %v1067 = vmul.f32 %v1037, %v1065
        %1069 = vrot.lane.b32.xlu0 %v1067, 96
        %v1070 = vpop.permute.xlu0 %1069
        %v1072 = vadd.f32 %v1061, %v1070
        %v1073 = vlaneseq
        %v1074 = vshrl.u32 %v1073, 7
        %v1075 = vlaneseq
        %v1076 = vand.u32 %v1075, 127
        %vm1077 = vcmp.ge.s32.totalorder %v1074, %v1076
        %v1078 = vsub.s32 %v1074, %v1076
        %v1079 = vsel %vm1077, %v1078, 0
        %v1080 = vcvt.s32.f32 %v1079
        %v1081 = vmul.f32 %v1080, -0.031748697
        %v1082 = vmul.f32 %v1081, 1.442695
        %v1083 = vpow.pop %v1082
        %v1084 = vsel %vm1077, %v1083, 0.0
        %v1085 = vmul.f32 %v1080, -0.012479112
        %v1086 = vmul.f32 %v1085, 1.442695
        %v1087 = vpow.pop %v1086
        %v1088 = vsel %vm1077, %v1087, 0.0
        %v1089 = vmul.f32 %v1080, -0.004933717
        %v1090 = vmul.f32 %v1089, 1.442695
        %v1091 = vpow.pop %v1090
        %v1092 = vsel %vm1077, %v1091, 0.0
        %v1093 = vmul.f32 %v1080, -0.001955035
        %v1094 = vmul.f32 %v1093, 1.442695
        %v1095 = vpow.pop %v1094
        %v1096 = vsel %vm1077, %v1095, 0.0
        %v1097 = vpack.c.bf16 %v1055, %v1055
        %v1098 = vpack.c.bf16 %v1072, %v1072
        %v1099 = vpack.c.bf16 %v1039, %v1039
        %1101 = vrot.lane.b32.xlu0 %v1098, 64
        %v1102 = vpop.permute.xlu0 %1101
        %vm1103 = vcmask 64512
        %v1105 = vsel %vm1103, %v1097, 0
        %v1108 = vsel %vm1103, %v1102, 0
        %1110 = vmatprep.subr.bf16.mxu0 0
        %1111 = vmatpush1.bf16.xpose.msra.mxu0 %v1108
        %1112 = vmatprep.subr.bf16.mxu0 0
        %1113 = vmatpush1.bf16.xpose.msra.mxu0 0
        %1114 = vmatprep.subr.bf16.mxu0 0
        %1115 = vmatpush1.bf16.xpose.msra.mxu0 0
        %1116 = vmatprep.subr.bf16.mxu0 0
        %1117 = vmatpush1.bf16.xpose.msra.mxu0 0
        %1118 = vmatprep.subr.bf16.mxu0 0
        %1119 = vmatpush1.bf16.xpose.msra.mxu0 0
        %1120 = vmatprep.subr.bf16.mxu0 0
        %1121 = vmatpush1.bf16.xpose.msra.mxu0 0
        %1122 = vmatprep.subr.bf16.mxu0 0
        %1123 = vmatpush1.bf16.xpose.msra.mxu0 0
        %1124 = vmatprep.subr.bf16.mxu0 0
        %1125 = vmatpush1.bf16.xpose.msra.mxu0 0
        %1126 = vmatprep.subr.bf16.mxu0 0
        %1127 = vmatpush1.bf16.xpose.msra.mxu0 0
        %1128 = vmatprep.subr.bf16.mxu0 0
        %1129 = vmatpush1.bf16.xpose.msra.mxu0 0
        %1130 = vmatprep.subr.bf16.mxu0 0
        %1131 = vmatpush1.bf16.xpose.msra.mxu0 0
        %1132 = vmatprep.subr.bf16.mxu0 0
        %1133 = vmatpush1.bf16.xpose.msra.mxu0 0
        %1134 = vmatprep.subr.bf16.mxu0 0
        %1135 = vmatpush1.bf16.xpose.msra.mxu0 0
        %1136 = vmatprep.subr.bf16.mxu0 0
        %1137 = vmatpush1.bf16.xpose.msra.mxu0 0
        %1138 = vmatprep.subr.bf16.mxu0 0
        %1139 = vmatpush1.bf16.xpose.msra.mxu0 0
        %1140 = vmatprep.subr.bf16.mxu0 0
        %1141 = vmatpush1.bf16.xpose.msra.mxu0 0
        %1142 = vmatprep.mubr.bf16.mxu0 0
        %1143 = vmatmul.mubr.bf16.gmra.mrb[0].mxu0 %v1105
        %v1144 = vpop.f32.mrb[0].mxu0
        %v1145 = vadd.f32 0.0, %v1144
        %v1146 = vpop.f32.mrb[0].mxu0
        %v1147 = vpop.f32.mrb[0].mxu0
        %v1148 = vpop.f32.mrb[0].mxu0
        %1149 = vdwg.mxu0
        %v1150 = vmul.f32 %v1145, %v1084
        %v1151 = vpack.c.bf16 %v1150, %v1150
        %v1153 = vsel %vm1103, %v1151, 0
        %vm1155 = vcmask 1043456
        %v1157 = vsel %vm1155, %v1099, 0
        %1159 = vmatprep.subr.bf16.mxu0 0
        %1160 = vmatpush1.bf16.msra.mxu0 %v1157
        %1161 = vmatprep.subr.bf16.mxu0 0
        %1162 = vmatpush1.bf16.msra.mxu0 0
        %1163 = vmatprep.subr.bf16.mxu0 0
        %1164 = vmatpush1.bf16.msra.mxu0 0
        %1165 = vmatprep.subr.bf16.mxu0 0
        %1166 = vmatpush1.bf16.msra.mxu0 0
        %1167 = vmatprep.subr.bf16.mxu0 0
        %1168 = vmatpush1.bf16.msra.mxu0 0
        %1169 = vmatprep.subr.bf16.mxu0 0
        %1170 = vmatpush1.bf16.msra.mxu0 0
        %1171 = vmatprep.subr.bf16.mxu0 0
        %1172 = vmatpush1.bf16.msra.mxu0 0
        %1173 = vmatprep.subr.bf16.mxu0 0
        %1174 = vmatpush1.bf16.msra.mxu0 0
        %1175 = vmatprep.subr.bf16.mxu0 0
        %1176 = vmatpush1.bf16.msra.mxu0 0
        %1177 = vmatprep.subr.bf16.mxu0 0
        %1178 = vmatpush1.bf16.msra.mxu0 0
        %1179 = vmatprep.subr.bf16.mxu0 0
        %1180 = vmatpush1.bf16.msra.mxu0 0
        %1181 = vmatprep.subr.bf16.mxu0 0
        %1182 = vmatpush1.bf16.msra.mxu0 0
        %1183 = vmatprep.subr.bf16.mxu0 0
        %1184 = vmatpush1.bf16.msra.mxu0 0
        %1185 = vmatprep.subr.bf16.mxu0 0
        %1186 = vmatpush1.bf16.msra.mxu0 0
        %1187 = vmatprep.subr.bf16.mxu0 0
        %1188 = vmatpush1.bf16.msra.mxu0 0
        %1189 = vmatprep.subr.bf16.mxu0 0
        %1190 = vmatpush1.bf16.msra.mxu0 0
        %1191 = vmatprep.mubr.bf16.mxu0 0
        %1192 = vmatmul.mubr.bf16.gmra.mrb[0].mxu0 %v1153
        %v1193 = vpop.f32.mrb[0].mxu0
        %v1194 = vadd.f32 0.0, %v1193
        %v1195 = vpop.f32.mrb[0].mxu0
        %v1196 = vpop.f32.mrb[0].mxu0
        %v1197 = vpop.f32.mrb[0].mxu0
        %1198 = vdwg.mxu0
        %v1199 = vsel %vm1103, %v1194, 0.0
        %1200 = vadd.xlane.f32.xlu0 %v1199
        %v1201 = vpop.xlane.xlu0 %1200
        %v1202 = vrcp.pop 8.0
        %v1203 = vmul.f32 %v1201, %v1202
        %v1204 = vsub.f32 %v1194, %v1203
        %v1205 = vmul.f32 %v1204, %v1204
        %v1206 = vsel %vm1103, %v1205, 0.0
        %1207 = vadd.xlane.f32.xlu0 %v1206
        %v1208 = vpop.xlane.xlu0 %1207
        %v1209 = vmul.f32 %v1208, %v1202
        %v1210 = vadd.f32 %v1209, 1e-05
        %v1211 = vrsqrt.pop %v1210
        %v1212 = vmul.f32 %v1204, %v1211
        %1214 = vrot.lane.b32.xlu0 %v1097, 120
        %v1215 = vpop.permute.xlu0 %1214
        %1216 = vrot.lane.b32.xlu0 %v1098, 56
        %v1217 = vpop.permute.xlu0 %1216
        %v1219 = vsel %vm1103, %v1215, 0
        %v1222 = vsel %vm1103, %v1217, 0
        %1224 = vmatprep.subr.bf16.mxu0 0
        %1225 = vmatpush1.bf16.xpose.msra.mxu0 %v1222
        %1226 = vmatprep.subr.bf16.mxu0 0
        %1227 = vmatpush1.bf16.xpose.msra.mxu0 0
        %1228 = vmatprep.subr.bf16.mxu0 0
        %1229 = vmatpush1.bf16.xpose.msra.mxu0 0
        %1230 = vmatprep.subr.bf16.mxu0 0
        %1231 = vmatpush1.bf16.xpose.msra.mxu0 0
        %1232 = vmatprep.subr.bf16.mxu0 0
        %1233 = vmatpush1.bf16.xpose.msra.mxu0 0
        %1234 = vmatprep.subr.bf16.mxu0 0
        %1235 = vmatpush1.bf16.xpose.msra.mxu0 0
        %1236 = vmatprep.subr.bf16.mxu0 0
        %1237 = vmatpush1.bf16.xpose.msra.mxu0 0
        %1238 = vmatprep.subr.bf16.mxu0 0
        %1239 = vmatpush1.bf16.xpose.msra.mxu0 0
        %1240 = vmatprep.subr.bf16.mxu0 0
        %1241 = vmatpush1.bf16.xpose.msra.mxu0 0
        %1242 = vmatprep.subr.bf16.mxu0 0
        %1243 = vmatpush1.bf16.xpose.msra.mxu0 0
        %1244 = vmatprep.subr.bf16.mxu0 0
        %1245 = vmatpush1.bf16.xpose.msra.mxu0 0
        %1246 = vmatprep.subr.bf16.mxu0 0
        %1247 = vmatpush1.bf16.xpose.msra.mxu0 0
        %1248 = vmatprep.subr.bf16.mxu0 0
        %1249 = vmatpush1.bf16.xpose.msra.mxu0 0
        %1250 = vmatprep.subr.bf16.mxu0 0
        %1251 = vmatpush1.bf16.xpose.msra.mxu0 0
        %1252 = vmatprep.subr.bf16.mxu0 0
        %1253 = vmatpush1.bf16.xpose.msra.mxu0 0
        %1254 = vmatprep.subr.bf16.mxu0 0
        %1255 = vmatpush1.bf16.xpose.msra.mxu0 0
        %1256 = vmatprep.mubr.bf16.mxu0 0
        %1257 = vmatmul.mubr.bf16.gmra.mrb[0].mxu0 %v1219
        %v1258 = vpop.f32.mrb[0].mxu0
        %v1259 = vadd.f32 0.0, %v1258
        %v1260 = vpop.f32.mrb[0].mxu0
        %v1261 = vpop.f32.mrb[0].mxu0
        %v1262 = vpop.f32.mrb[0].mxu0
        %1263 = vdwg.mxu0
        %v1264 = vmul.f32 %v1259, %v1088
        %v1265 = vpack.c.bf16 %v1264, %v1264
        %1267 = vrot.lane.b32.xlu0 %v1099, 120
        %v1268 = vpop.permute.xlu0 %1267
        %v1270 = vsel %vm1103, %v1265, 0
        %v1273 = vsel %vm1155, %v1268, 0
        %1275 = vmatprep.subr.bf16.mxu0 0
        %1276 = vmatpush1.bf16.msra.mxu0 %v1273
        %1277 = vmatprep.subr.bf16.mxu0 0
        %1278 = vmatpush1.bf16.msra.mxu0 0
        %1279 = vmatprep.subr.bf16.mxu0 0
        %1280 = vmatpush1.bf16.msra.mxu0 0
        %1281 = vmatprep.subr.bf16.mxu0 0
        %1282 = vmatpush1.bf16.msra.mxu0 0
        %1283 = vmatprep.subr.bf16.mxu0 0
        %1284 = vmatpush1.bf16.msra.mxu0 0
        %1285 = vmatprep.subr.bf16.mxu0 0
        %1286 = vmatpush1.bf16.msra.mxu0 0
        %1287 = vmatprep.subr.bf16.mxu0 0
        %1288 = vmatpush1.bf16.msra.mxu0 0
        %1289 = vmatprep.subr.bf16.mxu0 0
        %1290 = vmatpush1.bf16.msra.mxu0 0
        %1291 = vmatprep.subr.bf16.mxu0 0
        %1292 = vmatpush1.bf16.msra.mxu0 0
        %1293 = vmatprep.subr.bf16.mxu0 0
        %1294 = vmatpush1.bf16.msra.mxu0 0
        %1295 = vmatprep.subr.bf16.mxu0 0
        %1296 = vmatpush1.bf16.msra.mxu0 0
        %1297 = vmatprep.subr.bf16.mxu0 0
        %1298 = vmatpush1.bf16.msra.mxu0 0
        %1299 = vmatprep.subr.bf16.mxu0 0
        %1300 = vmatpush1.bf16.msra.mxu0 0
        %1301 = vmatprep.subr.bf16.mxu0 0
        %1302 = vmatpush1.bf16.msra.mxu0 0
        %1303 = vmatprep.subr.bf16.mxu0 0
        %1304 = vmatpush1.bf16.msra.mxu0 0
        %1305 = vmatprep.subr.bf16.mxu0 0
        %1306 = vmatpush1.bf16.msra.mxu0 0
        %1307 = vmatprep.mubr.bf16.mxu0 0
        %1308 = vmatmul.mubr.bf16.gmra.mrb[0].mxu0 %v1270
        %v1309 = vpop.f32.mrb[0].mxu0
        %v1310 = vadd.f32 0.0, %v1309
        %v1311 = vpop.f32.mrb[0].mxu0
        %v1312 = vpop.f32.mrb[0].mxu0
        %v1313 = vpop.f32.mrb[0].mxu0
        %1314 = vdwg.mxu0
        %v1315 = vsel %vm1103, %v1310, 0.0
        %1316 = vadd.xlane.f32.xlu0 %v1315
        %v1317 = vpop.xlane.xlu0 %1316
        %v1318 = vmul.f32 %v1317, %v1202
        %v1319 = vsub.f32 %v1310, %v1318
        %v1320 = vmul.f32 %v1319, %v1319
        %v1321 = vsel %vm1103, %v1320, 0.0
        %1322 = vadd.xlane.f32.xlu0 %v1321
        %v1323 = vpop.xlane.xlu0 %1322
        %v1324 = vmul.f32 %v1323, %v1202
        %v1325 = vadd.f32 %v1324, 1e-05
        %v1326 = vrsqrt.pop %v1325
        %v1327 = vmul.f32 %v1319, %v1326
        %1328 = vrot.lane.b32.xlu0 %v1097, 112
        %v1329 = vpop.permute.xlu0 %1328
        %1330 = vrot.lane.b32.xlu0 %v1098, 48
        %v1331 = vpop.permute.xlu0 %1330
        %v1333 = vsel %vm1103, %v1329, 0
        %v1336 = vsel %vm1103, %v1331, 0
        %1338 = vmatprep.subr.bf16.mxu0 0
        %1339 = vmatpush1.bf16.xpose.msra.mxu0 %v1336
        %1340 = vmatprep.subr.bf16.mxu0 0
        %1341 = vmatpush1.bf16.xpose.msra.mxu0 0
        %1342 = vmatprep.subr.bf16.mxu0 0
        %1343 = vmatpush1.bf16.xpose.msra.mxu0 0
        %1344 = vmatprep.subr.bf16.mxu0 0
        %1345 = vmatpush1.bf16.xpose.msra.mxu0 0
        %1346 = vmatprep.subr.bf16.mxu0 0
        %1347 = vmatpush1.bf16.xpose.msra.mxu0 0
        %1348 = vmatprep.subr.bf16.mxu0 0
        %1349 = vmatpush1.bf16.xpose.msra.mxu0 0
        %1350 = vmatprep.subr.bf16.mxu0 0
        %1351 = vmatpush1.bf16.xpose.msra.mxu0 0
        %1352 = vmatprep.subr.bf16.mxu0 0
        %1353 = vmatpush1.bf16.xpose.msra.mxu0 0
        %1354 = vmatprep.subr.bf16.mxu0 0
        %1355 = vmatpush1.bf16.xpose.msra.mxu0 0
        %1356 = vmatprep.subr.bf16.mxu0 0
        %1357 = vmatpush1.bf16.xpose.msra.mxu0 0
        %1358 = vmatprep.subr.bf16.mxu0 0
        %1359 = vmatpush1.bf16.xpose.msra.mxu0 0
        %1360 = vmatprep.subr.bf16.mxu0 0
        %1361 = vmatpush1.bf16.xpose.msra.mxu0 0
        %1362 = vmatprep.subr.bf16.mxu0 0
        %1363 = vmatpush1.bf16.xpose.msra.mxu0 0
        %1364 = vmatprep.subr.bf16.mxu0 0
        %1365 = vmatpush1.bf16.xpose.msra.mxu0 0
        %1366 = vmatprep.subr.bf16.mxu0 0
        %1367 = vmatpush1.bf16.xpose.msra.mxu0 0
        %1368 = vmatprep.subr.bf16.mxu0 0
        %1369 = vmatpush1.bf16.xpose.msra.mxu0 0
        %1370 = vmatprep.mubr.bf16.mxu0 0
        %1371 = vmatmul.mubr.bf16.gmra.mrb[0].mxu0 %v1333
        %v1372 = vpop.f32.mrb[0].mxu0
        %v1373 = vadd.f32 0.0, %v1372
        %v1374 = vpop.f32.mrb[0].mxu0
        %v1375 = vpop.f32.mrb[0].mxu0
        %v1376 = vpop.f32.mrb[0].mxu0
        %1377 = vdwg.mxu0
        %v1378 = vmul.f32 %v1373, %v1092
        %v1379 = vpack.c.bf16 %v1378, %v1378
        %1380 = vrot.lane.b32.xlu0 %v1099, 112
        %v1381 = vpop.permute.xlu0 %1380
        %v1383 = vsel %vm1103, %v1379, 0
        %v1386 = vsel %vm1155, %v1381, 0
        %1388 = vmatprep.subr.bf16.mxu0 0
        %1389 = vmatpush1.bf16.msra.mxu0 %v1386
        %1390 = vmatprep.subr.bf16.mxu0 0
        %1391 = vmatpush1.bf16.msra.mxu0 0
        %1392 = vmatprep.subr.bf16.mxu0 0
        %1393 = vmatpush1.bf16.msra.mxu0 0
        %1394 = vmatprep.subr.bf16.mxu0 0
        %1395 = vmatpush1.bf16.msra.mxu0 0
        %1396 = vmatprep.subr.bf16.mxu0 0
        %1397 = vmatpush1.bf16.msra.mxu0 0
        %1398 = vmatprep.subr.bf16.mxu0 0
        %1399 = vmatpush1.bf16.msra.mxu0 0
        %1400 = vmatprep.subr.bf16.mxu0 0
        %1401 = vmatpush1.bf16.msra.mxu0 0
        %1402 = vmatprep.subr.bf16.mxu0 0
        %1403 = vmatpush1.bf16.msra.mxu0 0
        %1404 = vmatprep.subr.bf16.mxu0 0
        %1405 = vmatpush1.bf16.msra.mxu0 0
        %1406 = vmatprep.subr.bf16.mxu0 0
        %1407 = vmatpush1.bf16.msra.mxu0 0
        %1408 = vmatprep.subr.bf16.mxu0 0
        %1409 = vmatpush1.bf16.msra.mxu0 0
        %1410 = vmatprep.subr.bf16.mxu0 0
        %1411 = vmatpush1.bf16.msra.mxu0 0
        %1412 = vmatprep.subr.bf16.mxu0 0
        %1413 = vmatpush1.bf16.msra.mxu0 0
        %1414 = vmatprep.subr.bf16.mxu0 0
        %1415 = vmatpush1.bf16.msra.mxu0 0
        %1416 = vmatprep.subr.bf16.mxu0 0
        %1417 = vmatpush1.bf16.msra.mxu0 0
        %1418 = vmatprep.subr.bf16.mxu0 0
        %1419 = vmatpush1.bf16.msra.mxu0 0
        %1420 = vmatprep.mubr.bf16.mxu0 0
        %1421 = vmatmul.mubr.bf16.gmra.mrb[0].mxu0 %v1383
        %v1422 = vpop.f32.mrb[0].mxu0
        %v1423 = vadd.f32 0.0, %v1422
        %v1424 = vpop.f32.mrb[0].mxu0
        %v1425 = vpop.f32.mrb[0].mxu0
        %v1426 = vpop.f32.mrb[0].mxu0
        %1427 = vdwg.mxu0
        %v1428 = vsel %vm1103, %v1423, 0.0
        %1429 = vadd.xlane.f32.xlu0 %v1428
        %v1430 = vpop.xlane.xlu0 %1429
        %v1431 = vmul.f32 %v1430, %v1202
        %v1432 = vsub.f32 %v1423, %v1431
        %v1433 = vmul.f32 %v1432, %v1432
        %v1434 = vsel %vm1103, %v1433, 0.0
        %1435 = vadd.xlane.f32.xlu0 %v1434
        %v1436 = vpop.xlane.xlu0 %1435
        %v1437 = vmul.f32 %v1436, %v1202
        %v1438 = vadd.f32 %v1437, 1e-05
        %v1439 = vrsqrt.pop %v1438
        %v1440 = vmul.f32 %v1432, %v1439
        %1441 = vrot.lane.b32.xlu0 %v1097, 104
        %v1442 = vpop.permute.xlu0 %1441
        %1443 = vrot.lane.b32.xlu0 %v1098, 40
        %v1444 = vpop.permute.xlu0 %1443
        %v1446 = vsel %vm1103, %v1442, 0
        %v1449 = vsel %vm1103, %v1444, 0
        %1451 = vmatprep.subr.bf16.mxu0 0
        %1452 = vmatpush1.bf16.xpose.msra.mxu0 %v1449
        %1453 = vmatprep.subr.bf16.mxu0 0
        %1454 = vmatpush1.bf16.xpose.msra.mxu0 0
        %1455 = vmatprep.subr.bf16.mxu0 0
        %1456 = vmatpush1.bf16.xpose.msra.mxu0 0
        %1457 = vmatprep.subr.bf16.mxu0 0
        %1458 = vmatpush1.bf16.xpose.msra.mxu0 0
        %1459 = vmatprep.subr.bf16.mxu0 0
        %1460 = vmatpush1.bf16.xpose.msra.mxu0 0
        %1461 = vmatprep.subr.bf16.mxu0 0
        %1462 = vmatpush1.bf16.xpose.msra.mxu0 0
        %1463 = vmatprep.subr.bf16.mxu0 0
        %1464 = vmatpush1.bf16.xpose.msra.mxu0 0
        %1465 = vmatprep.subr.bf16.mxu0 0
        %1466 = vmatpush1.bf16.xpose.msra.mxu0 0
        %1467 = vmatprep.subr.bf16.mxu0 0
        %1468 = vmatpush1.bf16.xpose.msra.mxu0 0
        %1469 = vmatprep.subr.bf16.mxu0 0
        %1470 = vmatpush1.bf16.xpose.msra.mxu0 0
        %1471 = vmatprep.subr.bf16.mxu0 0
        %1472 = vmatpush1.bf16.xpose.msra.mxu0 0
        %1473 = vmatprep.subr.bf16.mxu0 0
        %1474 = vmatpush1.bf16.xpose.msra.mxu0 0
        %1475 = vmatprep.subr.bf16.mxu0 0
        %1476 = vmatpush1.bf16.xpose.msra.mxu0 0
        %1477 = vmatprep.subr.bf16.mxu0 0
        %1478 = vmatpush1.bf16.xpose.msra.mxu0 0
        %1479 = vmatprep.subr.bf16.mxu0 0
        %1480 = vmatpush1.bf16.xpose.msra.mxu0 0
        %1481 = vmatprep.subr.bf16.mxu0 0
        %1482 = vmatpush1.bf16.xpose.msra.mxu0 0
        %1483 = vmatprep.mubr.bf16.mxu0 0
        %1484 = vmatmul.mubr.bf16.gmra.mrb[0].mxu0 %v1446
        %v1485 = vpop.f32.mrb[0].mxu0
        %v1486 = vadd.f32 0.0, %v1485
        %v1487 = vpop.f32.mrb[0].mxu0
        %v1488 = vpop.f32.mrb[0].mxu0
        %v1489 = vpop.f32.mrb[0].mxu0
        %1490 = vdwg.mxu0
        %v1491 = vmul.f32 %v1486, %v1096
        %v1492 = vpack.c.bf16 %v1491, %v1491
        %1493 = vrot.lane.b32.xlu0 %v1099, 104
        %v1494 = vpop.permute.xlu0 %1493
        %v1496 = vsel %vm1103, %v1492, 0
        %v1499 = vsel %vm1155, %v1494, 0
        %1501 = vmatprep.subr.bf16.mxu0 0
        %1502 = vmatpush1.bf16.msra.mxu0 %v1499
        %1503 = vmatprep.subr.bf16.mxu0 0
        %1504 = vmatpush1.bf16.msra.mxu0 0
        %1505 = vmatprep.subr.bf16.mxu0 0
        %1506 = vmatpush1.bf16.msra.mxu0 0
        %1507 = vmatprep.subr.bf16.mxu0 0
        %1508 = vmatpush1.bf16.msra.mxu0 0
        %1509 = vmatprep.subr.bf16.mxu0 0
        %1510 = vmatpush1.bf16.msra.mxu0 0
        %1511 = vmatprep.subr.bf16.mxu0 0
        %1512 = vmatpush1.bf16.msra.mxu0 0
        %1513 = vmatprep.subr.bf16.mxu0 0
        %1514 = vmatpush1.bf16.msra.mxu0 0
        %1515 = vmatprep.subr.bf16.mxu0 0
        %1516 = vmatpush1.bf16.msra.mxu0 0
        %1517 = vmatprep.subr.bf16.mxu0 0
        %1518 = vmatpush1.bf16.msra.mxu0 0
        %1519 = vmatprep.subr.bf16.mxu0 0
        %1520 = vmatpush1.bf16.msra.mxu0 0
        %1521 = vmatprep.subr.bf16.mxu0 0
        %1522 = vmatpush1.bf16.msra.mxu0 0
        %1523 = vmatprep.subr.bf16.mxu0 0
        %1524 = vmatpush1.bf16.msra.mxu0 0
        %1525 = vmatprep.subr.bf16.mxu0 0
        %1526 = vmatpush1.bf16.msra.mxu0 0
        %1527 = vmatprep.subr.bf16.mxu0 0
        %1528 = vmatpush1.bf16.msra.mxu0 0
        %1529 = vmatprep.subr.bf16.mxu0 0
        %1530 = vmatpush1.bf16.msra.mxu0 0
        %1531 = vmatprep.subr.bf16.mxu0 0
        %1532 = vmatpush1.bf16.msra.mxu0 0
        %1533 = vmatprep.mubr.bf16.mxu0 0
        %1534 = vmatmul.mubr.bf16.gmra.mrb[0].mxu0 %v1496
        %v1535 = vpop.f32.mrb[0].mxu0
        %v1536 = vadd.f32 0.0, %v1535
        %v1537 = vpop.f32.mrb[0].mxu0
        %v1538 = vpop.f32.mrb[0].mxu0
        %v1539 = vpop.f32.mrb[0].mxu0
        %1540 = vdwg.mxu0
        %v1541 = vsel %vm1103, %v1536, 0.0
        %1542 = vadd.xlane.f32.xlu0 %v1541
        %v1543 = vpop.xlane.xlu0 %1542
        %v1544 = vmul.f32 %v1543, %v1202
        %v1545 = vsub.f32 %v1536, %v1544
        %v1546 = vmul.f32 %v1545, %v1545
        %v1547 = vsel %vm1103, %v1546, 0.0
        %1548 = vadd.xlane.f32.xlu0 %v1547
        %v1549 = vpop.xlane.xlu0 %1548
        %v1550 = vmul.f32 %v1549, %v1202
        %v1551 = vadd.f32 %v1550, 1e-05
        %v1552 = vrsqrt.pop %v1551
        %v1553 = vmul.f32 %v1545, %v1552
        %1555 = vrot.lane.b32.xlu0 %v1327, 8
        %v1556 = vpop.permute.xlu0 %1555
        %1559 = vrot.lane.b32.xlu0 %v1440, 16
        %v1560 = vpop.permute.xlu0 %1559
        %1563 = vrot.lane.b32.xlu0 %v1553, 24
        %v1564 = vpop.permute.xlu0 %1563
        %v1566 = vsel %vm1103, %v1212, %v1556
        %vm1567 = vcmask 130048
        %v1568 = vsel %vm1567, %v1566, %v1560
        %vm1569 = vcmask 195584
        %v1570 = vsel %vm1569, %v1568, %v1564
        %v1571 = vld [vmem:[%s770] sm:$0x1]
        %v1573 = vlaneseq
        %v1574 = vshrl.u32 %v1573, 7
        %v1575 = vsub.s32 0, %v1574
        %v1576 = vrot.slane %v1571, %v1575
        %v1578 = vmul.f32 %v1570, %v1576
        %v1579 = vld [vmem:[%s778] sm:$0x1]
        %v1581 = vlaneseq
        %v1582 = vshrl.u32 %v1581, 7
        %v1583 = vsub.s32 0, %v1582
        %v1584 = vrot.slane %v1579, %v1583
        %v1586 = vadd.f32 %v1578, %v1584
        %v1587 = vxor.u32 %v1039, 2147483648
        %v1588 = vmul.f32 %v1587, 1.442695
        %v1589 = vpow.pop %v1588
        %v1590 = vadd.f32 %v1589, 1.0
        %v1591 = vrcp.pop %v1590
        %v1592 = vmul.f32 1.0, %v1591
        %v1593 = vmul.f32 %v1039, %v1592
        %1595 = vrot.lane.b32.xlu0 %v1586, 32
        %v1596 = vpop.permute.xlu0 %1595
        %v1598 = vmul.f32 %v1593, %v1596
        %v1599 = vpack.c.bf16 %v1598, %v1598
        %v1600 = vld [vmem:[%s925] sm:$0xf]
        %v1601 = vld [vmem:[%s925 + $0x4] sm:$0xf]
        %v1602 = vld [vmem:[%s925 + $0x8] sm:$0xf]
        %v1603 = vld [vmem:[%s925 + $0xc] sm:$0xf]
        %1605 = vrot.lane.b32.xlu0 %v1599, 96
        %v1606 = vpop.permute.xlu0 %1605
        %v1611 = vunpack.c.l.b16 %v1600
        %v1612 = vunpack.c.l.b16 %v1601
        %v1613 = vunpack.c.l.b16 %v1602
        %v1614 = vunpack.c.l.b16 %v1603
        %v1615 = vpack.c.b16 %v1612, %v1611
        %v1616 = vpack.c.b16 %v1614, %v1613
        %v1620 = vsel %vm943, %v1606, 0
        %1622 = vmatprep.subr.bf16.mxu0 0
        %1623 = vmatpush1.bf16.msra.mxu0 %v1615
        %1624 = vmatprep.subr.bf16.mxu0 0
        %1625 = vmatpush1.bf16.msra.mxu0 %v1616
        %1626 = vmatprep.subr.bf16.mxu0 0
        %1627 = vmatpush1.bf16.msra.mxu0 0
        %1628 = vmatprep.subr.bf16.mxu0 0
        %1629 = vmatpush1.bf16.msra.mxu0 0
        %1630 = vmatprep.subr.bf16.mxu0 0
        %1631 = vmatpush1.bf16.msra.mxu0 0
        %1632 = vmatprep.subr.bf16.mxu0 0
        %1633 = vmatpush1.bf16.msra.mxu0 0
        %1634 = vmatprep.subr.bf16.mxu0 0
        %1635 = vmatpush1.bf16.msra.mxu0 0
        %1636 = vmatprep.subr.bf16.mxu0 0
        %1637 = vmatpush1.bf16.msra.mxu0 0
        %1638 = vmatprep.subr.bf16.mxu0 0
        %1639 = vmatpush1.bf16.msra.mxu0 0
        %1640 = vmatprep.subr.bf16.mxu0 0
        %1641 = vmatpush1.bf16.msra.mxu0 0
        %1642 = vmatprep.subr.bf16.mxu0 0
        %1643 = vmatpush1.bf16.msra.mxu0 0
        %1644 = vmatprep.subr.bf16.mxu0 0
        %1645 = vmatpush1.bf16.msra.mxu0 0
        %1646 = vmatprep.subr.bf16.mxu0 0
        %1647 = vmatpush1.bf16.msra.mxu0 0
        %1648 = vmatprep.subr.bf16.mxu0 0
        %1649 = vmatpush1.bf16.msra.mxu0 0
        %1650 = vmatprep.subr.bf16.mxu0 0
        %1651 = vmatpush1.bf16.msra.mxu0 0
        %1652 = vmatprep.subr.bf16.mxu0 0
        %1653 = vmatpush1.bf16.msra.mxu0 0
        %1654 = vmatprep.mubr.bf16.mxu0 0
        %1655 = vmatmul.mubr.bf16.gmra.mrb[0].mxu0 %v1620
        %v1656 = vpop.f32.mrb[0].mxu0
        %v1657 = vadd.f32 %v942, %v1656
        %v1658 = vpop.f32.mrb[0].mxu0
        %v1659 = vpop.f32.mrb[0].mxu0
        %v1660 = vpop.f32.mrb[0].mxu0
        %1661 = vdwg.mxu0
        %v1662 = vsel %vm943, %v1657, 0.0
        %1663 = vadd.xlane.f32.xlu0 %v1662
        %v1664 = vpop.xlane.xlu0 %1663
        %v1665 = vmul.f32 %v1664, %v947
        %v1666 = vsub.f32 %v1657, %v1665
        %v1667 = vmul.f32 %v1666, %v1666
        %v1668 = vsel %vm943, %v1667, 0.0
        %1669 = vadd.xlane.f32.xlu0 %v1668
        %v1670 = vpop.xlane.xlu0 %1669
        %v1671 = vmul.f32 %v1670, %v947
        %v1672 = vadd.f32 %v1671, 1e-05
        %v1673 = vrsqrt.pop %v1672
        %v1674 = vmul.f32 %v1666, %v1673
        %v1675 = vld [vmem:[%s786] sm:$0x1]
        %v1677 = vlaneseq
        %v1678 = vshrl.u32 %v1677, 7
        %v1679 = vsub.s32 0, %v1678
        %v1680 = vrot.slane %v1675, %v1679
        %v1682 = vmul.f32 %v1674, %v1680
        %v1683 = vld [vmem:[%s794] sm:$0x1]
        %v1685 = vlaneseq
        %v1686 = vshrl.u32 %v1685, 7
        %v1687 = vsub.s32 0, %v1686
        %v1688 = vrot.slane %v1683, %v1687
        %v1690 = vadd.f32 %v1682, %v1688
        %v1691 = vpack.c.bf16 %v1690, %v1690
        %v1692 = vld [vmem:[%s803] sm:$0xf]
        %v1693 = vld [vmem:[%s803 + $0x4] sm:$0xf]
        %v1694 = vld [vmem:[%s803 + $0x8] sm:$0xf]
        %v1695 = vld [vmem:[%s803 + $0xc] sm:$0xf]
        %v1696 = vld [vmem:[%s811] sm:$0x1]
        %v1698 = vlaneseq
        %v1699 = vshrl.u32 %v1698, 7
        %v1700 = vsub.s32 0, %v1699
        %v1701 = vrot.slane %v1696, %v1700
        %v1707 = vunpack.c.l.b16 %v1692
        %v1708 = vunpack.c.l.b16 %v1693
        %v1709 = vunpack.c.l.b16 %v1694
        %v1710 = vunpack.c.l.b16 %v1695
        %v1711 = vpack.c.b16 %v1708, %v1707
        %v1712 = vpack.c.b16 %v1710, %v1709
        %v1716 = vsel %vm943, %v1691, 0
        %1718 = vmatprep.subr.bf16.mxu0 0
        %1719 = vmatpush1.bf16.msra.mxu0 %v1711
        %1720 = vmatprep.subr.bf16.mxu0 0
        %1721 = vmatpush1.bf16.msra.mxu0 %v1712
        %1722 = vmatprep.subr.bf16.mxu0 0
        %1723 = vmatpush1.bf16.msra.mxu0 0
        %1724 = vmatprep.subr.bf16.mxu0 0
        %1725 = vmatpush1.bf16.msra.mxu0 0
        %1726 = vmatprep.subr.bf16.mxu0 0
        %1727 = vmatpush1.bf16.msra.mxu0 0
        %1728 = vmatprep.subr.bf16.mxu0 0
        %1729 = vmatpush1.bf16.msra.mxu0 0
        %1730 = vmatprep.subr.bf16.mxu0 0
        %1731 = vmatpush1.bf16.msra.mxu0 0
        %1732 = vmatprep.subr.bf16.mxu0 0
        %1733 = vmatpush1.bf16.msra.mxu0 0
        %1734 = vmatprep.subr.bf16.mxu0 0
        %1735 = vmatpush1.bf16.msra.mxu0 0
        %1736 = vmatprep.subr.bf16.mxu0 0
        %1737 = vmatpush1.bf16.msra.mxu0 0
        %1738 = vmatprep.subr.bf16.mxu0 0
        %1739 = vmatpush1.bf16.msra.mxu0 0
        %1740 = vmatprep.subr.bf16.mxu0 0
        %1741 = vmatpush1.bf16.msra.mxu0 0
        %1742 = vmatprep.subr.bf16.mxu0 0
        %1743 = vmatpush1.bf16.msra.mxu0 0
        %1744 = vmatprep.subr.bf16.mxu0 0
        %1745 = vmatpush1.bf16.msra.mxu0 0
        %1746 = vmatprep.subr.bf16.mxu0 0
        %1747 = vmatpush1.bf16.msra.mxu0 0
        %1748 = vmatprep.subr.bf16.mxu0 0
        %1749 = vmatpush1.bf16.msra.mxu0 0
        %1750 = vmatprep.mubr.bf16.mxu0 0
        %1751 = vmatmul.mubr.bf16.gmra.mrb[0].mxu0 %v1716
        %v1752 = vpop.f32.mrb[0].mxu0
        %v1753 = vadd.f32 %v1701, %v1752
        %v1754 = vpop.f32.mrb[0].mxu0
        %v1755 = vpop.f32.mrb[0].mxu0
        %v1756 = vpop.f32.mrb[0].mxu0
        %1757 = vdwg.mxu0
        %v1758 = vmul.f32 %v1753, 0.5
        %v1759 = vmul.f32 %v1753, 0.70710677
        %v1760 = verf.f32.pop %v1759
        %v1761 = vadd.f32 %v1760, 1.0
        %v1762 = vmul.f32 %v1758, %v1761
        %v1763 = vpack.c.bf16 %v1762, %v1762
        %v1764 = vld [vmem:[%s930] sm:$0xf]
        %v1765 = vld [vmem:[%s930 + $0x4] sm:$0xf]
        %v1766 = vld [vmem:[%s930 + $0x8] sm:$0xf]
        %v1767 = vld [vmem:[%s930 + $0xc] sm:$0xf]
        %v1768 = vld [vmem:[%s930 + $0x10] sm:$0xf]
        %v1769 = vld [vmem:[%s930 + $0x14] sm:$0xf]
        %v1770 = vld [vmem:[%s930 + $0x18] sm:$0xf]
        %v1771 = vld [vmem:[%s930 + $0x1c] sm:$0xf]
        %v1772 = vld [vmem:[%s933] sm:$0x1]
        %v1774 = vlaneseq
        %v1775 = vshrl.u32 %v1774, 7
        %v1776 = vsub.s32 0, %v1775
        %v1777 = vrot.slane %v1772, %v1776
        %v1787 = vunpack.c.l.b16 %v1764
        %v1788 = vunpack.c.l.b16 %v1765
        %v1789 = vunpack.c.l.b16 %v1766
        %v1790 = vunpack.c.l.b16 %v1767
        %v1791 = vunpack.c.l.b16 %v1768
        %v1792 = vunpack.c.l.b16 %v1769
        %v1793 = vunpack.c.l.b16 %v1770
        %v1794 = vunpack.c.l.b16 %v1771
        %v1795 = vpack.c.b16 %v1788, %v1787
        %v1796 = vpack.c.b16 %v1790, %v1789
        %v1797 = vpack.c.b16 %v1792, %v1791
        %v1798 = vpack.c.b16 %v1794, %v1793
        %vm1803 = vcmask 523264
        %v1805 = vsel %vm1803, %v1763, 0
        %1807 = vmatprep.subr.bf16.mxu0 0
        %1808 = vmatpush1.bf16.msra.mxu0 %v1795
        %1809 = vmatprep.subr.bf16.mxu0 0
        %1810 = vmatpush1.bf16.msra.mxu0 %v1796
        %1811 = vmatprep.subr.bf16.mxu0 0
        %1812 = vmatpush1.bf16.msra.mxu0 %v1797
        %1813 = vmatprep.subr.bf16.mxu0 0
        %1814 = vmatpush1.bf16.msra.mxu0 %v1798
        %1815 = vmatprep.subr.bf16.mxu0 0
        %1816 = vmatpush1.bf16.msra.mxu0 0
        %1817 = vmatprep.subr.bf16.mxu0 0
        %1818 = vmatpush1.bf16.msra.mxu0 0
        %1819 = vmatprep.subr.bf16.mxu0 0
        %1820 = vmatpush1.bf16.msra.mxu0 0
        %1821 = vmatprep.subr.bf16.mxu0 0
        %1822 = vmatpush1.bf16.msra.mxu0 0
        %1823 = vmatprep.subr.bf16.mxu0 0
        %1824 = vmatpush1.bf16.msra.mxu0 0
        %1825 = vmatprep.subr.bf16.mxu0 0
        %1826 = vmatpush1.bf16.msra.mxu0 0
        %1827 = vmatprep.subr.bf16.mxu0 0
        %1828 = vmatpush1.bf16.msra.mxu0 0
        %1829 = vmatprep.subr.bf16.mxu0 0
        %1830 = vmatpush1.bf16.msra.mxu0 0
        %1831 = vmatprep.subr.bf16.mxu0 0
        %1832 = vmatpush1.bf16.msra.mxu0 0
        %1833 = vmatprep.subr.bf16.mxu0 0
        %1834 = vmatpush1.bf16.msra.mxu0 0
        %1835 = vmatprep.subr.bf16.mxu0 0
        %1836 = vmatpush1.bf16.msra.mxu0 0
        %1837 = vmatprep.subr.bf16.mxu0 0
        %1838 = vmatpush1.bf16.msra.mxu0 0
        %1839 = vmatprep.mubr.bf16.mxu0 0
        %1840 = vmatmul.mubr.bf16.gmra.mrb[0].mxu0 %v1805
        %v1841 = vpop.f32.mrb[0].mxu0
        %v1842 = vadd.f32 %v1777, %v1841
        %v1843 = vpop.f32.mrb[0].mxu0
        %v1844 = vpop.f32.mrb[0].mxu0
        %v1845 = vpop.f32.mrb[0].mxu0
        %1846 = vdwg.mxu0
        %v1847 = vadd.f32 %v1842, %v1657
        %1848 = vst.msk [vmem:[#allocation2] sm:$0xff] %vm943, %v1847
        %p1849 = scmp.eq.s32.totalorder %s50, 1
        // Predicated region
        $region137: #{tpu_custom_call.1} parent=87 // pred_check
          %p1850 = pneg %p1849
        $region138: #{tpu_custom_call.1} parent=87 // pred_check_branch
          %1852 = sbr.rel (%p1850) target = $region140
        $region139: #{tpu_custom_call.1} parent=87 // pred_region
          %1853 = vst.msk [vmem:[%s911] sm:$0xff] %vm943, %v1847
        $region140: #{tpu_custom_call.1} parent=87 // pred_fallthru
          _
        %s1854 = sand.u32 %s487, 1
        %s1855 = scalar_lea.sflag [#allocation5], %s1854
        %s1856 = sand.u32 %s487, 1
        %s1857 = smul.addr %s1856, 8
        %s1858 = scalar_lea.vmem [#allocation21], %s1857
        // Predicated region
        $region141: #{tpu_custom_call.1} parent=87 // pred_check
          %p1859 = pneg %p497
        $region142: #{tpu_custom_call.1} parent=87 // pred_check_branch
          %1861 = sbr.rel (%p1859) target = $region144
        $region143: #{tpu_custom_call.1} parent=87 // pred_region
          %s1863 = ssub.s32 128, 128
          %1864 = vsyncadd %s1855, %s1863
          %s1865 = smul.addr %s49, 128
          %s1866 = scalar_lea.hbm %s17, %s1865
          %s1868 = sshll.u32 %s1858, 4
          %s1869 = int_to_ptr.vmem [resolvable:$true] %s1868
          %1871 = dma.vmem_to_hbm [thread:$0]  %s1869, 128, %s1866, %s1855
        $region144: #{tpu_custom_call.1} parent=87 // pred_fallthru
          _
      $region88: #{tpu_custom_call.1} parent=5 // pred_fallthru
        _
      %p1872 = scmp.le.s32.totalorder 2, %s40
      // Predicated region
      $region145: #{tpu_custom_call.1} parent=5 // pred_check
        %p1873 = pneg %p1872
      $region146: #{tpu_custom_call.1} parent=5 // pred_check_branch
        %1875 = sbr.rel (%p1873) target = $region148
      $region147: #{tpu_custom_call.1} parent=5 // pred_region
        %s1876 = ssub.s32 %s40, 2
        // Predicated region
        $region149: #{tpu_custom_call.1} parent=147 // pred_check
          %p1877 = pneg %p503
        $region150: #{tpu_custom_call.1} parent=147 // pred_check_branch
          %1879 = sbr.rel (%p1877) target = $region152
        $region151: #{tpu_custom_call.1} parent=147 // pred_region
          %s1880 = sand.u32 %s488, 1
          %s1881 = scalar_lea.sflag [#allocation5], %s1880
          %s1882 = sand.u32 %s488, 1
          %s1883 = smul.addr %s1882, 8
          %s1884 = scalar_lea.vmem [#allocation21], %s1883
          %1885 = dma.done %s1881, 128
        $region152: #{tpu_custom_call.1} parent=147 // pred_fallthru
          _
      $region148: #{tpu_custom_call.1} parent=5 // pred_fallthru
        _
    $region6: #{tpu_custom_call.1} parent=1 // loop_footer
      %s44 = sadd.s32 1, %s40
    $region7: #{tpu_custom_call.1} parent=1 // loop_footer_branch
      %39 = sbr.rel target = $region3
    $region8: #{tpu_custom_call.1} parent=1 // loop_exit
      _
    %1886 = vsyncpa [#allocation4], 1
    %s1887 = scalar_lea.sflag [#allocation4], 1
    %1888 = vsyncpa %s1887, 1
    %1889 = vsyncpa [#allocation7], 1
    %1890 = vsyncpa [#allocation10], 1
    %s1891 = scalar_lea.sflag [#allocation10], 1
    %1892 = vsyncpa %s1891, 1
    %1893 = vsyncpa [#allocation13], 1
    %s1894 = scalar_lea.sflag [#allocation13], 1
    %1895 = vsyncpa %s1894, 1
    %1896 = vsyncpa [#allocation16], 1
    %s1897 = scalar_lea.sflag [#allocation16], 1
    %1898 = vsyncpa %s1897, 1
    %1899 = vsyncpa [#allocation19], 1
    %s1900 = scalar_lea.sflag [#allocation19], 1
    %1901 = vsyncpa %s1900, 1
    %1902 = vsyncpa [#allocation5], 1
    %s1903 = scalar_lea.sflag [#allocation5], 1
    %1904 = vsyncpa %s1903, 1

</llo_original>
